<compile_context>
chip_gen: v6e
topology: v6e:2x2x1
jax: 0.10.0
libtpu: 0.0.40
codegen_flags: <defaults>
</compile_context>

<pallas_src>
import functools

import numpy as np
import jax
import jax.numpy as jnp
from jax.experimental import pallas as pl
from jax.experimental.pallas import tpu as pltpu


def _fused_cnn_kernel(x_ref, m_ref, w1_ref, w2_ref, w3_ref, o_ref, *, W):
    """conv1+ReLU -> conv2+ReLU -> conv3+ReLU, fully in VMEM/vregs.

    x_ref : (C0, L) f32      activations; spatial (and possibly batch) on lanes
    m_ref : (9, 1, L) f32    per-tap multiplicative border masks (tap 4 == ones)
    wN_ref: (Cout, 9*Cin+1)  bf16 im2col weights, tap-major K, bias in last col
    o_ref : (C3, L) f32
    """
    L = x_ref.shape[-1]

    def conv3x3_relu(a, w_ref):
        # a: (Cin, L) f32 -> (Cout, L) f32, one MXU dot per layer.
        rows = []
        for ky in range(3):
            for kx in range(3):
                dy, dx, t = ky - 1, kx - 1, ky * 3 + kx
                if dy == 0 and dx == 0:
                    rows.append(a)                       # centre tap: as-is
                else:
                    shift = (-(dy * W + dx)) % L         # static lane rotation
                    rows.append(pltpu.roll(a, shift, axis=1) * m_ref[t])
        rows.append(m_ref[4])                            # ones row -> bias column
        # Single bf16 cast of the assembled (9*Cin+1, L) patch (f32 masking on
        # v5e's VPU; bf16 only on the MXU operand).
        patch = jnp.concatenate(rows, axis=0).astype(jnp.bfloat16)
        y = jnp.dot(w_ref[...], patch, preferred_element_type=jnp.float32)
        return jnp.maximum(y, 0.0)

    a1 = conv3x3_relu(x_ref[...], w1_ref)
    a2 = conv3x3_relu(a1, w2_ref)
    a3 = conv3x3_relu(a2, w3_ref)
    o_ref[...] = a3.astype(o_ref.dtype)


def _tap_masks(H, W, n_images):
    """(9, 1, L) f32 multiplicative masks implementing zero padding.

    Position p on the lane axis belongs to image p // (H*W), row (p % HW)//W,
    col p % W, so the masks also zero any cross-image leakage introduced by the
    lane rotations when the batch is folded onto the lane axis.
    """
    HW = H * W
    p = np.arange(n_images * HW)
    py = (p % HW) // W
    px = p % W
    rows = []
    for ky in range(3):
        for kx in range(3):
            dy, dx = ky - 1, kx - 1
            m = ((py + dy >= 0) & (py + dy < H) & (px + dx >= 0) & (px + dx < W))
            rows.append(m.astype(np.float32))
    return jnp.asarray(np.stack(rows)[:, None, :])


def _prep_weight(w_hwio, b):
    """HWIO (3,3,Cin,Cout) + (Cout,) -> (Cout, 9*Cin+1) bf16, bias folded in."""
    cin, cout = int(w_hwio.shape[2]), int(w_hwio.shape[3])
    wk = jnp.transpose(w_hwio, (3, 0, 1, 2)).reshape(cout, 9 * cin)
    wk = jnp.concatenate([wk, b.reshape(cout, 1)], axis=1)
    return wk.astype(jnp.bfloat16)


def _multi_tensorcore_chip():
    """True on chips that expose 2 TensorCores behind one device (v7x)."""
    try:
        kind = jax.devices()[0].device_kind.lower()
    except Exception:
        return False
    return "v7" in kind


def net_forward(x_nchw, params, batch_parallel=None):
    """Pallas implementation of Net.forward (three conv3x3(pad=1)+ReLU layers)."""
    N, C0, H, W = x_nchw.shape
    HW = H * W
    C3 = int(params[-1][0].shape[3])
    if batch_parallel is None:
        batch_parallel = _multi_tensorcore_chip()

    weights = [_prep_weight(w, b) for (w, b) in params]
    couts = [int(w.shape[0]) for w in weights]
    kdims = [int(w.shape[1]) for w in weights]

    if batch_parallel:
        # v7x: one image per grid step -> batch axis maps across both TCs.
        L = HW
        masks = _tap_masks(H, W, 1)
        x_in = x_nchw.reshape(N, C0, HW)
        grid = (N,)
        x_spec = pl.BlockSpec((None, C0, HW), lambda n: (n, 0, 0))
        out_shape = jax.ShapeDtypeStruct((N, C3, HW), x_nchw.dtype)
        out_spec = pl.BlockSpec((None, C3, HW), lambda n: (n, 0, 0))
    else:
        # v5e/v6e: fold the batch into the lane axis, single grid step.
        L = N * HW
        masks = _tap_masks(H, W, N)
        x_in = jnp.transpose(x_nchw, (1, 0, 2, 3)).reshape(C0, L)
        grid = (1,)
        x_spec = pl.BlockSpec((C0, L), lambda n: (0, 0))
        out_shape = jax.ShapeDtypeStruct((C3, L), x_nchw.dtype)
        out_spec = pl.BlockSpec((C3, L), lambda n: (0, 0))

    in_specs = [x_spec, pl.BlockSpec((9, 1, L), lambda n: (0, 0, 0))]
    in_specs += [pl.BlockSpec((c, k), lambda n: (0, 0))
                 for c, k in zip(couts, kdims)]

    flops = 2 * N * HW * sum(k * c for k, c in zip(kdims, couts))
    bytes_accessed = 4 * (x_nchw.size + N * C3 * HW + masks.size) \
        + 2 * sum(w.size for w in weights)

    kernel = functools.partial(_fused_cnn_kernel, W=W)
    out = pl.pallas_call(
        kernel,
        out_shape=out_shape,
        grid_spec=pltpu.PrefetchScalarGridSpec(
            num_scalar_prefetch=0,
            grid=grid,
            in_specs=in_specs,
            out_specs=out_spec,
        ),
        compiler_params=pltpu.CompilerParams(
            dimension_semantics=("parallel",)),
        cost_estimate=pl.CostEstimate(flops=int(flops), transcendentals=0,
                                      bytes_accessed=int(bytes_accessed)),
    )(x_in, masks, *weights)

    if batch_parallel:
        return out.reshape(N, C3, H, W)
    return jnp.transpose(out.reshape(C3, N, H, W), (1, 0, 2, 3))


def init_net_params(key, in_size, out_size):
    """Deterministic params; PyTorch-style U(-1/sqrt(fan_in), 1/sqrt(fan_in))."""
    chans = [in_size, 10, 20, out_size]
    params = []
    for i in range(3):
        cin, cout = chans[i], chans[i + 1]
        key, kw, kb = jax.random.split(key, 3)
        bound = 1.0 / jnp.sqrt(float(cin * 3 * 3))
        w = jax.random.uniform(kw, (3, 3, cin, cout), jnp.float32, -bound, bound)
        b = jax.random.uniform(kb, (cout,), jnp.float32, -bound, bound)
        params.append((w, b))
    return params


def net_forward_ref(x_nchw, params):
    """Pure-JAX reference (lax.conv, f32 HIGHEST) for correctness checking."""
    x = x_nchw
    for w, b in params:
        y = jax.lax.conv_general_dilated(
            x, w, window_strides=(1, 1), padding=((1, 1), (1, 1)),
            dimension_numbers=("NCHW", "HWIO", "NCHW"),
            precision=jax.lax.Precision.HIGHEST)
        x = jnp.maximum(y + b[None, :, None, None], 0.0)
    return x


if __name__ == "__main__":
    in_size, out_size = 4, 8
    N, H, W = 2, 16, 16

    key = jax.random.PRNGKey(0)
    key, kx = jax.random.split(key)
    x = jax.random.normal(kx, (N, in_size, H, W), jnp.float32)   # NCHW like PyTorch

    params = init_net_params(key, in_size, out_size)
    ref = jax.block_until_ready(net_forward_ref(x, params))

    # Exercise the auto-detected path plus both explicit layouts so the script
    # is correct regardless of which TPU generation it lands on.
    for mode in (None, False, True):
        out = jax.block_until_ready(net_forward(x, params, batch_parallel=mode))
        assert out.shape == (N, out_size, H, W), (mode, out.shape)
        # bf16 MXU operands / f32 accumulation vs f32 HIGHEST reference.
        err = float(jnp.max(jnp.abs(out - ref)))
        assert jnp.allclose(out, ref, atol=1e-2, rtol=1e-2), (mode, err)

    print("KERNEL_OK")
</pallas_src>

<mosaic_0001>
module attributes {stable_mosaic.version = 11 : i64} {
  func.func @_fused_cnn_kernel(%arg0: i32, %arg1: memref<4x512xf32, #tpu.memory_space<vmem>>, %arg2: memref<9x1x512xf32, #tpu.memory_space<vmem>>, %arg3: memref<10x37xbf16, #tpu.memory_space<vmem>>, %arg4: memref<20x91xbf16, #tpu.memory_space<vmem>>, %arg5: memref<8x181xbf16, #tpu.memory_space<vmem>>, %arg6: memref<8x512xf32, #tpu.memory_space<vmem>>) attributes {dimension_semantics = [#tpu.dimension_semantics<parallel>], iteration_bounds = array<i64: 1>, scalar_prefetch = 0 : i64, scratch_operands = 0 : i64, tpu.core_type = #tpu.core_type<tc>, window_params = [{pipeline_mode = #tpu.pipeline_mode<synchronous>, transform_indices = @transform_0, window_bounds = array<i64: 4, 512>}, {pipeline_mode = #tpu.pipeline_mode<synchronous>, transform_indices = @transform_1, window_bounds = array<i64: 9, 1, 512>}, {pipeline_mode = #tpu.pipeline_mode<synchronous>, transform_indices = @transform_2, window_bounds = array<i64: 10, 37>}, {pipeline_mode = #tpu.pipeline_mode<synchronous>, transform_indices = @transform_3, window_bounds = array<i64: 20, 91>}, {pipeline_mode = #tpu.pipeline_mode<synchronous>, transform_indices = @transform_4, window_bounds = array<i64: 8, 181>}, {pipeline_mode = #tpu.pipeline_mode<synchronous>, transform_indices = @transform_5, window_bounds = array<i64: 8, 512>}]} {
    %c0 = arith.constant 0 : index
    %c0_0 = arith.constant 0 : index
    %0 = vector.load %arg1[%c0, %c0_0] : memref<4x512xf32, #tpu.memory_space<vmem>>, vector<4x512xf32>
    %c17_i32 = arith.constant 17 : i32
    %1 = tpu.dynamic_rotate %0 by %c17_i32 dim 1 : vector<4x512xf32>, i32 -> vector<4x512xf32>
    %c0_1 = arith.constant 0 : index
    %c0_2 = arith.constant 0 : index
    %c0_3 = arith.constant 0 : index
    %2 = vector.load %arg2[%c0_1, %c0_2, %c0_3] : memref<9x1x512xf32, #tpu.memory_space<vmem>>, vector<1x1x512xf32>
    %3 = vector.shape_cast %2 : vector<1x1x512xf32> to vector<1x512xf32>
    %4 = vector.broadcast %3 : vector<1x512xf32> to vector<4x512xf32>
    %5 = arith.mulf %1, %4 : vector<4x512xf32>
    %c16_i32 = arith.constant 16 : i32
    %6 = tpu.dynamic_rotate %0 by %c16_i32 dim 1 : vector<4x512xf32>, i32 -> vector<4x512xf32>
    %c1 = arith.constant 1 : index
    %c0_4 = arith.constant 0 : index
    %c0_5 = arith.constant 0 : index
    %7 = vector.load %arg2[%c1, %c0_4, %c0_5] : memref<9x1x512xf32, #tpu.memory_space<vmem>>, vector<1x1x512xf32>
    %8 = vector.shape_cast %7 : vector<1x1x512xf32> to vector<1x512xf32>
    %9 = vector.broadcast %8 : vector<1x512xf32> to vector<4x512xf32>
    %10 = arith.mulf %6, %9 : vector<4x512xf32>
    %c15_i32 = arith.constant 15 : i32
    %11 = tpu.dynamic_rotate %0 by %c15_i32 dim 1 : vector<4x512xf32>, i32 -> vector<4x512xf32>
    %c2 = arith.constant 2 : index
    %c0_6 = arith.constant 0 : index
    %c0_7 = arith.constant 0 : index
    %12 = vector.load %arg2[%c2, %c0_6, %c0_7] : memref<9x1x512xf32, #tpu.memory_space<vmem>>, vector<1x1x512xf32>
    %13 = vector.shape_cast %12 : vector<1x1x512xf32> to vector<1x512xf32>
    %14 = vector.broadcast %13 : vector<1x512xf32> to vector<4x512xf32>
    %15 = arith.mulf %11, %14 : vector<4x512xf32>
    %c1_i32 = arith.constant 1 : i32
    %16 = tpu.dynamic_rotate %0 by %c1_i32 dim 1 : vector<4x512xf32>, i32 -> vector<4x512xf32>
    %c3 = arith.constant 3 : index
    %c0_8 = arith.constant 0 : index
    %c0_9 = arith.constant 0 : index
    %17 = vector.load %arg2[%c3, %c0_8, %c0_9] : memref<9x1x512xf32, #tpu.memory_space<vmem>>, vector<1x1x512xf32>
    %18 = vector.shape_cast %17 : vector<1x1x512xf32> to vector<1x512xf32>
    %19 = vector.broadcast %18 : vector<1x512xf32> to vector<4x512xf32>
    %20 = arith.mulf %16, %19 : vector<4x512xf32>
    %c511_i32 = arith.constant 511 : i32
    %21 = tpu.dynamic_rotate %0 by %c511_i32 dim 1 : vector<4x512xf32>, i32 -> vector<4x512xf32>
    %c5 = arith.constant 5 : index
    %c0_10 = arith.constant 0 : index
    %c0_11 = arith.constant 0 : index
    %22 = vector.load %arg2[%c5, %c0_10, %c0_11] : memref<9x1x512xf32, #tpu.memory_space<vmem>>, vector<1x1x512xf32>
    %23 = vector.shape_cast %22 : vector<1x1x512xf32> to vector<1x512xf32>
    %24 = vector.broadcast %23 : vector<1x512xf32> to vector<4x512xf32>
    %25 = arith.mulf %21, %24 : vector<4x512xf32>
    %c497_i32 = arith.constant 497 : i32
    %26 = tpu.dynamic_rotate %0 by %c497_i32 dim 1 : vector<4x512xf32>, i32 -> vector<4x512xf32>
    %c6 = arith.constant 6 : index
    %c0_12 = arith.constant 0 : index
    %c0_13 = arith.constant 0 : index
    %27 = vector.load %arg2[%c6, %c0_12, %c0_13] : memref<9x1x512xf32, #tpu.memory_space<vmem>>, vector<1x1x512xf32>
    %28 = vector.shape_cast %27 : vector<1x1x512xf32> to vector<1x512xf32>
    %29 = vector.broadcast %28 : vector<1x512xf32> to vector<4x512xf32>
    %30 = arith.mulf %26, %29 : vector<4x512xf32>
    %c496_i32 = arith.constant 496 : i32
    %31 = tpu.dynamic_rotate %0 by %c496_i32 dim 1 : vector<4x512xf32>, i32 -> vector<4x512xf32>
    %c7 = arith.constant 7 : index
    %c0_14 = arith.constant 0 : index
    %c0_15 = arith.constant 0 : index
    %32 = vector.load %arg2[%c7, %c0_14, %c0_15] : memref<9x1x512xf32, #tpu.memory_space<vmem>>, vector<1x1x512xf32>
    %33 = vector.shape_cast %32 : vector<1x1x512xf32> to vector<1x512xf32>
    %34 = vector.broadcast %33 : vector<1x512xf32> to vector<4x512xf32>
    %35 = arith.mulf %31, %34 : vector<4x512xf32>
    %c495_i32 = arith.constant 495 : i32
    %36 = tpu.dynamic_rotate %0 by %c495_i32 dim 1 : vector<4x512xf32>, i32 -> vector<4x512xf32>
    %c8 = arith.constant 8 : index
    %c0_16 = arith.constant 0 : index
    %c0_17 = arith.constant 0 : index
    %37 = vector.load %arg2[%c8, %c0_16, %c0_17] : memref<9x1x512xf32, #tpu.memory_space<vmem>>, vector<1x1x512xf32>
    %38 = vector.shape_cast %37 : vector<1x1x512xf32> to vector<1x512xf32>
    %39 = vector.broadcast %38 : vector<1x512xf32> to vector<4x512xf32>
    %40 = arith.mulf %36, %39 : vector<4x512xf32>
    %c4 = arith.constant 4 : index
    %c0_18 = arith.constant 0 : index
    %c0_19 = arith.constant 0 : index
    %41 = vector.load %arg2[%c4, %c0_18, %c0_19] : memref<9x1x512xf32, #tpu.memory_space<vmem>>, vector<1x1x512xf32>
    %42 = vector.shape_cast %41 : vector<1x1x512xf32> to vector<1x512xf32>
    %43 = tpu.concatenate %5, %10, %15, %20, %0, %25, %30, %35, %40, %42 in 0 : vector<4x512xf32>, vector<4x512xf32>, vector<4x512xf32>, vector<4x512xf32>, vector<4x512xf32>, vector<4x512xf32>, vector<4x512xf32>, vector<4x512xf32>, vector<4x512xf32>, vector<1x512xf32> -> vector<37x512xf32>
    %44 = arith.truncf %43 : vector<37x512xf32> to vector<37x512xbf16>
    %c0_20 = arith.constant 0 : index
    %c0_21 = arith.constant 0 : index
    %45 = vector.load %arg3[%c0_20, %c0_21] : memref<10x37xbf16, #tpu.memory_space<vmem>>, vector<10x37xbf16>
    %cst = arith.constant dense<0.000000e+00> : vector<10x512xf32>
    %46 = tpu.matmul %45, %44, %cst {dimension_numbers = #tpu.dot_dimension_numbers<[1], [0], [0], [1], [0, 0, 1, 1], [], []>} : vector<10x37xbf16>, vector<37x512xbf16>, vector<10x512xf32> -> vector<10x512xf32>
    %cst_22 = arith.constant 0.000000e+00 : f32
    %47 = vector.broadcast %cst_22 : f32 to vector<10x512xf32>
    %48 = arith.maximumf %46, %47 : vector<10x512xf32>
    %c17_i32_23 = arith.constant 17 : i32
    %49 = tpu.dynamic_rotate %48 by %c17_i32_23 dim 1 : vector<10x512xf32>, i32 -> vector<10x512xf32>
    %c0_24 = arith.constant 0 : index
    %c0_25 = arith.constant 0 : index
    %c0_26 = arith.constant 0 : index
    %50 = vector.load %arg2[%c0_24, %c0_25, %c0_26] : memref<9x1x512xf32, #tpu.memory_space<vmem>>, vector<1x1x512xf32>
    %51 = vector.shape_cast %50 : vector<1x1x512xf32> to vector<1x512xf32>
    %52 = vector.broadcast %51 : vector<1x512xf32> to vector<10x512xf32>
    %53 = arith.mulf %49, %52 : vector<10x512xf32>
    %c16_i32_27 = arith.constant 16 : i32
    %54 = tpu.dynamic_rotate %48 by %c16_i32_27 dim 1 : vector<10x512xf32>, i32 -> vector<10x512xf32>
    %c1_28 = arith.constant 1 : index
    %c0_29 = arith.constant 0 : index
    %c0_30 = arith.constant 0 : index
    %55 = vector.load %arg2[%c1_28, %c0_29, %c0_30] : memref<9x1x512xf32, #tpu.memory_space<vmem>>, vector<1x1x512xf32>
    %56 = vector.shape_cast %55 : vector<1x1x512xf32> to vector<1x512xf32>
    %57 = vector.broadcast %56 : vector<1x512xf32> to vector<10x512xf32>
    %58 = arith.mulf %54, %57 : vector<10x512xf32>
    %c15_i32_31 = arith.constant 15 : i32
    %59 = tpu.dynamic_rotate %48 by %c15_i32_31 dim 1 : vector<10x512xf32>, i32 -> vector<10x512xf32>
    %c2_32 = arith.constant 2 : index
    %c0_33 = arith.constant 0 : index
    %c0_34 = arith.constant 0 : index
    %60 = vector.load %arg2[%c2_32, %c0_33, %c0_34] : memref<9x1x512xf32, #tpu.memory_space<vmem>>, vector<1x1x512xf32>
    %61 = vector.shape_cast %60 : vector<1x1x512xf32> to vector<1x512xf32>
    %62 = vector.broadcast %61 : vector<1x512xf32> to vector<10x512xf32>
    %63 = arith.mulf %59, %62 : vector<10x512xf32>
    %c1_i32_35 = arith.constant 1 : i32
    %64 = tpu.dynamic_rotate %48 by %c1_i32_35 dim 1 : vector<10x512xf32>, i32 -> vector<10x512xf32>
    %c3_36 = arith.constant 3 : index
    %c0_37 = arith.constant 0 : index
    %c0_38 = arith.constant 0 : index
    %65 = vector.load %arg2[%c3_36, %c0_37, %c0_38] : memref<9x1x512xf32, #tpu.memory_space<vmem>>, vector<1x1x512xf32>
    %66 = vector.shape_cast %65 : vector<1x1x512xf32> to vector<1x512xf32>
    %67 = vector.broadcast %66 : vector<1x512xf32> to vector<10x512xf32>
    %68 = arith.mulf %64, %67 : vector<10x512xf32>
    %c511_i32_39 = arith.constant 511 : i32
    %69 = tpu.dynamic_rotate %48 by %c511_i32_39 dim 1 : vector<10x512xf32>, i32 -> vector<10x512xf32>
    %c5_40 = arith.constant 5 : index
    %c0_41 = arith.constant 0 : index
    %c0_42 = arith.constant 0 : index
    %70 = vector.load %arg2[%c5_40, %c0_41, %c0_42] : memref<9x1x512xf32, #tpu.memory_space<vmem>>, vector<1x1x512xf32>
    %71 = vector.shape_cast %70 : vector<1x1x512xf32> to vector<1x512xf32>
    %72 = vector.broadcast %71 : vector<1x512xf32> to vector<10x512xf32>
    %73 = arith.mulf %69, %72 : vector<10x512xf32>
    %c497_i32_43 = arith.constant 497 : i32
    %74 = tpu.dynamic_rotate %48 by %c497_i32_43 dim 1 : vector<10x512xf32>, i32 -> vector<10x512xf32>
    %c6_44 = arith.constant 6 : index
    %c0_45 = arith.constant 0 : index
    %c0_46 = arith.constant 0 : index
    %75 = vector.load %arg2[%c6_44, %c0_45, %c0_46] : memref<9x1x512xf32, #tpu.memory_space<vmem>>, vector<1x1x512xf32>
    %76 = vector.shape_cast %75 : vector<1x1x512xf32> to vector<1x512xf32>
    %77 = vector.broadcast %76 : vector<1x512xf32> to vector<10x512xf32>
    %78 = arith.mulf %74, %77 : vector<10x512xf32>
    %c496_i32_47 = arith.constant 496 : i32
    %79 = tpu.dynamic_rotate %48 by %c496_i32_47 dim 1 : vector<10x512xf32>, i32 -> vector<10x512xf32>
    %c7_48 = arith.constant 7 : index
    %c0_49 = arith.constant 0 : index
    %c0_50 = arith.constant 0 : index
    %80 = vector.load %arg2[%c7_48, %c0_49, %c0_50] : memref<9x1x512xf32, #tpu.memory_space<vmem>>, vector<1x1x512xf32>
    %81 = vector.shape_cast %80 : vector<1x1x512xf32> to vector<1x512xf32>
    %82 = vector.broadcast %81 : vector<1x512xf32> to vector<10x512xf32>
    %83 = arith.mulf %79, %82 : vector<10x512xf32>
    %c495_i32_51 = arith.constant 495 : i32
    %84 = tpu.dynamic_rotate %48 by %c495_i32_51 dim 1 : vector<10x512xf32>, i32 -> vector<10x512xf32>
    %c8_52 = arith.constant 8 : index
    %c0_53 = arith.constant 0 : index
    %c0_54 = arith.constant 0 : index
    %85 = vector.load %arg2[%c8_52, %c0_53, %c0_54] : memref<9x1x512xf32, #tpu.memory_space<vmem>>, vector<1x1x512xf32>
    %86 = vector.shape_cast %85 : vector<1x1x512xf32> to vector<1x512xf32>
    %87 = vector.broadcast %86 : vector<1x512xf32> to vector<10x512xf32>
    %88 = arith.mulf %84, %87 : vector<10x512xf32>
    %c4_55 = arith.constant 4 : index
    %c0_56 = arith.constant 0 : index
    %c0_57 = arith.constant 0 : index
    %89 = vector.load %arg2[%c4_55, %c0_56, %c0_57] : memref<9x1x512xf32, #tpu.memory_space<vmem>>, vector<1x1x512xf32>
    %90 = vector.shape_cast %89 : vector<1x1x512xf32> to vector<1x512xf32>
    %91 = tpu.concatenate %53, %58, %63, %68, %48, %73, %78, %83, %88, %90 in 0 : vector<10x512xf32>, vector<10x512xf32>, vector<10x512xf32>, vector<10x512xf32>, vector<10x512xf32>, vector<10x512xf32>, vector<10x512xf32>, vector<10x512xf32>, vector<10x512xf32>, vector<1x512xf32> -> vector<91x512xf32>
    %92 = arith.truncf %91 : vector<91x512xf32> to vector<91x512xbf16>
    %c0_58 = arith.constant 0 : index
    %c0_59 = arith.constant 0 : index
    %93 = vector.load %arg4[%c0_58, %c0_59] : memref<20x91xbf16, #tpu.memory_space<vmem>>, vector<20x91xbf16>
    %cst_60 = arith.constant dense<0.000000e+00> : vector<20x512xf32>
    %94 = tpu.matmul %93, %92, %cst_60 {dimension_numbers = #tpu.dot_dimension_numbers<[1], [0], [0], [1], [0, 0, 1, 1], [], []>} : vector<20x91xbf16>, vector<91x512xbf16>, vector<20x512xf32> -> vector<20x512xf32>
    %cst_61 = arith.constant 0.000000e+00 : f32
    %95 = vector.broadcast %cst_61 : f32 to vector<20x512xf32>
    %96 = arith.maximumf %94, %95 : vector<20x512xf32>
    %c17_i32_62 = arith.constant 17 : i32
    %97 = tpu.dynamic_rotate %96 by %c17_i32_62 dim 1 : vector<20x512xf32>, i32 -> vector<20x512xf32>
    %c0_63 = arith.constant 0 : index
    %c0_64 = arith.constant 0 : index
    %c0_65 = arith.constant 0 : index
    %98 = vector.load %arg2[%c0_63, %c0_64, %c0_65] : memref<9x1x512xf32, #tpu.memory_space<vmem>>, vector<1x1x512xf32>
    %99 = vector.shape_cast %98 : vector<1x1x512xf32> to vector<1x512xf32>
    %100 = vector.broadcast %99 : vector<1x512xf32> to vector<20x512xf32>
    %101 = arith.mulf %97, %100 : vector<20x512xf32>
    %c16_i32_66 = arith.constant 16 : i32
    %102 = tpu.dynamic_rotate %96 by %c16_i32_66 dim 1 : vector<20x512xf32>, i32 -> vector<20x512xf32>
    %c1_67 = arith.constant 1 : index
    %c0_68 = arith.constant 0 : index
    %c0_69 = arith.constant 0 : index
    %103 = vector.load %arg2[%c1_67, %c0_68, %c0_69] : memref<9x1x512xf32, #tpu.memory_space<vmem>>, vector<1x1x512xf32>
    %104 = vector.shape_cast %103 : vector<1x1x512xf32> to vector<1x512xf32>
    %105 = vector.broadcast %104 : vector<1x512xf32> to vector<20x512xf32>
    %106 = arith.mulf %102, %105 : vector<20x512xf32>
    %c15_i32_70 = arith.constant 15 : i32
    %107 = tpu.dynamic_rotate %96 by %c15_i32_70 dim 1 : vector<20x512xf32>, i32 -> vector<20x512xf32>
    %c2_71 = arith.constant 2 : index
    %c0_72 = arith.constant 0 : index
    %c0_73 = arith.constant 0 : index
    %108 = vector.load %arg2[%c2_71, %c0_72, %c0_73] : memref<9x1x512xf32, #tpu.memory_space<vmem>>, vector<1x1x512xf32>
    %109 = vector.shape_cast %108 : vector<1x1x512xf32> to vector<1x512xf32>
    %110 = vector.broadcast %109 : vector<1x512xf32> to vector<20x512xf32>
    %111 = arith.mulf %107, %110 : vector<20x512xf32>
    %c1_i32_74 = arith.constant 1 : i32
    %112 = tpu.dynamic_rotate %96 by %c1_i32_74 dim 1 : vector<20x512xf32>, i32 -> vector<20x512xf32>
    %c3_75 = arith.constant 3 : index
    %c0_76 = arith.constant 0 : index
    %c0_77 = arith.constant 0 : index
    %113 = vector.load %arg2[%c3_75, %c0_76, %c0_77] : memref<9x1x512xf32, #tpu.memory_space<vmem>>, vector<1x1x512xf32>
    %114 = vector.shape_cast %113 : vector<1x1x512xf32> to vector<1x512xf32>
    %115 = vector.broadcast %114 : vector<1x512xf32> to vector<20x512xf32>
    %116 = arith.mulf %112, %115 : vector<20x512xf32>
    %c511_i32_78 = arith.constant 511 : i32
    %117 = tpu.dynamic_rotate %96 by %c511_i32_78 dim 1 : vector<20x512xf32>, i32 -> vector<20x512xf32>
    %c5_79 = arith.constant 5 : index
    %c0_80 = arith.constant 0 : index
    %c0_81 = arith.constant 0 : index
    %118 = vector.load %arg2[%c5_79, %c0_80, %c0_81] : memref<9x1x512xf32, #tpu.memory_space<vmem>>, vector<1x1x512xf32>
    %119 = vector.shape_cast %118 : vector<1x1x512xf32> to vector<1x512xf32>
    %120 = vector.broadcast %119 : vector<1x512xf32> to vector<20x512xf32>
    %121 = arith.mulf %117, %120 : vector<20x512xf32>
    %c497_i32_82 = arith.constant 497 : i32
    %122 = tpu.dynamic_rotate %96 by %c497_i32_82 dim 1 : vector<20x512xf32>, i32 -> vector<20x512xf32>
    %c6_83 = arith.constant 6 : index
    %c0_84 = arith.constant 0 : index
    %c0_85 = arith.constant 0 : index
    %123 = vector.load %arg2[%c6_83, %c0_84, %c0_85] : memref<9x1x512xf32, #tpu.memory_space<vmem>>, vector<1x1x512xf32>
    %124 = vector.shape_cast %123 : vector<1x1x512xf32> to vector<1x512xf32>
    %125 = vector.broadcast %124 : vector<1x512xf32> to vector<20x512xf32>
    %126 = arith.mulf %122, %125 : vector<20x512xf32>
    %c496_i32_86 = arith.constant 496 : i32
    %127 = tpu.dynamic_rotate %96 by %c496_i32_86 dim 1 : vector<20x512xf32>, i32 -> vector<20x512xf32>
    %c7_87 = arith.constant 7 : index
    %c0_88 = arith.constant 0 : index
    %c0_89 = arith.constant 0 : index
    %128 = vector.load %arg2[%c7_87, %c0_88, %c0_89] : memref<9x1x512xf32, #tpu.memory_space<vmem>>, vector<1x1x512xf32>
    %129 = vector.shape_cast %128 : vector<1x1x512xf32> to vector<1x512xf32>
    %130 = vector.broadcast %129 : vector<1x512xf32> to vector<20x512xf32>
    %131 = arith.mulf %127, %130 : vector<20x512xf32>
    %c495_i32_90 = arith.constant 495 : i32
    %132 = tpu.dynamic_rotate %96 by %c495_i32_90 dim 1 : vector<20x512xf32>, i32 -> vector<20x512xf32>
    %c8_91 = arith.constant 8 : index
    %c0_92 = arith.constant 0 : index
    %c0_93 = arith.constant 0 : index
    %133 = vector.load %arg2[%c8_91, %c0_92, %c0_93] : memref<9x1x512xf32, #tpu.memory_space<vmem>>, vector<1x1x512xf32>
    %134 = vector.shape_cast %133 : vector<1x1x512xf32> to vector<1x512xf32>
    %135 = vector.broadcast %134 : vector<1x512xf32> to vector<20x512xf32>
    %136 = arith.mulf %132, %135 : vector<20x512xf32>
    %c4_94 = arith.constant 4 : index
    %c0_95 = arith.constant 0 : index
    %c0_96 = arith.constant 0 : index
    %137 = vector.load %arg2[%c4_94, %c0_95, %c0_96] : memref<9x1x512xf32, #tpu.memory_space<vmem>>, vector<1x1x512xf32>
    %138 = vector.shape_cast %137 : vector<1x1x512xf32> to vector<1x512xf32>
    %139 = tpu.concatenate %101, %106, %111, %116, %96, %121, %126, %131, %136, %138 in 0 : vector<20x512xf32>, vector<20x512xf32>, vector<20x512xf32>, vector<20x512xf32>, vector<20x512xf32>, vector<20x512xf32>, vector<20x512xf32>, vector<20x512xf32>, vector<20x512xf32>, vector<1x512xf32> -> vector<181x512xf32>
    %140 = arith.truncf %139 : vector<181x512xf32> to vector<181x512xbf16>
    %c0_97 = arith.constant 0 : index
    %c0_98 = arith.constant 0 : index
    %141 = vector.load %arg5[%c0_97, %c0_98] : memref<8x181xbf16, #tpu.memory_space<vmem>>, vector<8x181xbf16>
    %cst_99 = arith.constant dense<0.000000e+00> : vector<8x512xf32>
    %142 = tpu.matmul %141, %140, %cst_99 {dimension_numbers = #tpu.dot_dimension_numbers<[1], [0], [0], [1], [0, 0, 1, 1], [], []>} : vector<8x181xbf16>, vector<181x512xbf16>, vector<8x512xf32> -> vector<8x512xf32>
    %cst_100 = arith.constant 0.000000e+00 : f32
    %143 = vector.broadcast %cst_100 : f32 to vector<8x512xf32>
    %144 = arith.maximumf %142, %143 : vector<8x512xf32>
    %c0_101 = arith.constant 0 : index
    %c0_102 = arith.constant 0 : index
    %145 = vector.load %arg6[%c0_101, %c0_102] : memref<8x512xf32, #tpu.memory_space<vmem>>, vector<8x512xf32>
    tpu.vector_store %arg6[%c0_101, %c0_102], %144 {strides = array<i32>} : memref<8x512xf32, #tpu.memory_space<vmem>>, vector<8x512xf32>,
    return
  }
  func.func @transform_0(%arg0: i32) -> (i32, i32) {
    %c0_i32 = arith.constant 0 : i32
    %c0_i32_0 = arith.constant 0 : i32
    %c0_i32_1 = arith.constant 0 : i32
    return %c0_i32, %c0_i32_0 : i32, i32
  }
  func.func @transform_1(%arg0: i32) -> (i32, i32, i32) {
    %c0_i32 = arith.constant 0 : i32
    %c0_i32_0 = arith.constant 0 : i32
    %c0_i32_1 = arith.constant 0 : i32
    %c0_i32_2 = arith.constant 0 : i32
    return %c0_i32, %c0_i32_0, %c0_i32_1 : i32, i32, i32
  }
  func.func @transform_2(%arg0: i32) -> (i32, i32) {
    %c0_i32 = arith.constant 0 : i32
    %c0_i32_0 = arith.constant 0 : i32
    %c0_i32_1 = arith.constant 0 : i32
    return %c0_i32, %c0_i32_0 : i32, i32
  }
  func.func @transform_3(%arg0: i32) -> (i32, i32) {
    %c0_i32 = arith.constant 0 : i32
    %c0_i32_0 = arith.constant 0 : i32
    %c0_i32_1 = arith.constant 0 : i32
    return %c0_i32, %c0_i32_0 : i32, i32
  }
  func.func @transform_4(%arg0: i32) -> (i32, i32) {
    %c0_i32 = arith.constant 0 : i32
    %c0_i32_0 = arith.constant 0 : i32
    %c0_i32_1 = arith.constant 0 : i32
    return %c0_i32, %c0_i32_0 : i32, i32
  }
  func.func @transform_5(%arg0: i32) -> (i32, i32) {
    %c0_i32 = arith.constant 0 : i32
    %c0_i32_0 = arith.constant 0 : i32
    %c0_i32_1 = arith.constant 0 : i32
    return %c0_i32, %c0_i32_0 : i32, i32
  }
}

</mosaic_0001>

<llo_original>
// kernel: tpu_custom_call.1
$region0: #{tpu_custom_call.1}
  #allocation0 [shape = 'u32[]', space=smem, size = 0x4, offset = 0x4, fixed_abs, tag = 'smem constant byte address 0x4 - core index']
  #allocation1 [shape = 'u32[144,128]{1,0:T(1,128)}', space=vmem, size = 0x12000, scoped, tag = 'internal scratch']
  %s0 = inlined_call_operand.hbm [shape: f32[4,512], index: 0, kind: input, shape index: {}]
  %s1 = inlined_call_operand.hbm [shape: f32[9,1,512], index: 1, kind: input, shape index: {}]
  %s2 = inlined_call_operand.hbm [shape: bf16[10,37], index: 2, kind: input, shape index: {}]
  %s3 = inlined_call_operand.hbm [shape: bf16[20,91], index: 3, kind: input, shape index: {}]
  %s4 = inlined_call_operand.hbm [shape: bf16[8,181], index: 4, kind: input, shape index: {}]
  %s5 = inlined_call_operand.hbm [shape: f32[8,512], index: 5, kind: output, shape index: {}]
  %s6 = sld [smem:[#allocation0]]
  $region50: #{tpu_custom_call.1} parent=0
    _
  %s8 = ssub.s32 1, %s6
  %s9 = scalar_select 0, %s8, %s6
  $region1: #{tpu_custom_call.1} parent=0
    #allocation2 [shape = 'u8[8192]{0}', space=vmem, size = 0x2000, scoped, tag = 'input window, operand 0, single buffered']
    #allocation3 [shape = 's32[1]{0}', space=sflag, size = 0x4, scoped, tag = 'scoped memory for tpu_custom_call.1']
    #allocation4 [shape = 's32[1]{0}', space=sflag, size = 0x4, scoped, tag = 'scoped memory for tpu_custom_call.1']
    #allocation5 [shape = 'u8[18432]{0}', space=vmem, size = 0x4800, scoped, tag = 'input window, operand 1, single buffered']
    #allocation6 [shape = 's32[1]{0}', space=sflag, size = 0x4, scoped, tag = 'scoped memory for tpu_custom_call.1']
    #allocation7 [shape = 'u8[4096]{0}', space=vmem, size = 0x1000, scoped, tag = 'input window, operand 2, single buffered']
    #allocation8 [shape = 'u8[6144]{0}', space=vmem, size = 0x1800, scoped, tag = 'input window, operand 3, single buffered']
    #allocation9 [shape = 's32[1]{0}', space=sflag, size = 0x4, scoped, tag = 'scoped memory for tpu_custom_call.1']
    #allocation10 [shape = 'u8[4096]{0}', space=vmem, size = 0x1000, scoped, tag = 'input window, operand 4, single buffered']
    #allocation11 [shape = 'u8[16384]{0}', space=vmem, size = 0x4000, scoped, tag = 'output window, operand 0, single buffered']
    %10 = vsyncpa [#allocation3], 0
    %11 = vsyncpa [#allocation6], 0
    %12 = vsyncpa [#allocation9], 0
    %13 = vsyncpa [#allocation4], 0
    // Predicated region
    $region2: #{tpu_custom_call.1} parent=1 // pred_check
      _
    $region3: #{tpu_custom_call.1} parent=1 // pred_check_branch
      %15 = sbr.rel (0) target = $region5
    $region4: #{tpu_custom_call.1} parent=1 // pred_region
      %s17 = ssub.s32 256, 256
      %18 = vsyncadd [#allocation3], %s17
      %s20 = sshll.u32 [#allocation2], 4
      %s21 = int_to_ptr.vmem [resolvable:$true] %s20
      %23 = dma.hbm_to_vmem [thread:$0]  %s0, 256, %s21, [#allocation3]
    $region5: #{tpu_custom_call.1} parent=1 // pred_fallthru
      _
    // Predicated region
    $region6: #{tpu_custom_call.1} parent=1 // pred_check
      _
    $region7: #{tpu_custom_call.1} parent=1 // pred_check_branch
      %25 = sbr.rel (0) target = $region9
    $region8: #{tpu_custom_call.1} parent=1 // pred_region
      %s27 = ssub.s32 576, 576
      %28 = vsyncadd [#allocation6], %s27
      %s29 = sshll.u32 [#allocation5], 4
      %s30 = int_to_ptr.vmem [resolvable:$true] %s29
      %35 = dma.hbm_to_vmem [thread:$0]  %s1, 576, %s30, [#allocation6], 64, 64, 4
    $region9: #{tpu_custom_call.1} parent=1 // pred_fallthru
      _
    // Predicated region
    $region10: #{tpu_custom_call.1} parent=1 // pred_check
      _
    $region11: #{tpu_custom_call.1} parent=1 // pred_check_branch
      %37 = sbr.rel (0) target = $region13
    $region12: #{tpu_custom_call.1} parent=1 // pred_region
      %s39 = ssub.s32 128, 128
      %40 = vsyncadd [#allocation6], %s39
      %s41 = sshll.u32 [#allocation7], 4
      %s42 = int_to_ptr.vmem [resolvable:$true] %s41
      %47 = dma.hbm_to_vmem [thread:$0]  %s2, 128, %s42, [#allocation6], 64, 64, 4
    $region13: #{tpu_custom_call.1} parent=1 // pred_fallthru
      _
    // Predicated region
    $region14: #{tpu_custom_call.1} parent=1 // pred_check
      _
    $region15: #{tpu_custom_call.1} parent=1 // pred_check_branch
      %49 = sbr.rel (0) target = $region17
    $region16: #{tpu_custom_call.1} parent=1 // pred_region
      %s51 = ssub.s32 192, 192
      %52 = vsyncadd [#allocation9], %s51
      %s53 = sshll.u32 [#allocation8], 4
      %s54 = int_to_ptr.vmem [resolvable:$true] %s53
      %59 = dma.hbm_to_vmem [thread:$0]  %s3, 192, %s54, [#allocation9], 64, 64, 4
    $region17: #{tpu_custom_call.1} parent=1 // pred_fallthru
      _
    // Predicated region
    $region18: #{tpu_custom_call.1} parent=1 // pred_check
      _
    $region19: #{tpu_custom_call.1} parent=1 // pred_check_branch
      %61 = sbr.rel (0) target = $region21
    $region20: #{tpu_custom_call.1} parent=1 // pred_region
      %s63 = ssub.s32 128, 128
      %64 = vsyncadd [#allocation9], %s63
      %s66 = sshll.u32 [#allocation10], 4
      %s67 = int_to_ptr.vmem [resolvable:$true] %s66
      %69 = dma.hbm_to_vmem [thread:$0]  %s4, 128, %s67, [#allocation9]
    $region21: #{tpu_custom_call.1} parent=1 // pred_fallthru
      _
    // Predicated region
    $region22: #{tpu_custom_call.1} parent=1 // pred_check
      _
    $region23: #{tpu_custom_call.1} parent=1 // pred_check_branch
      %71 = sbr.rel (0) target = $region25
    $region24: #{tpu_custom_call.1} parent=1 // pred_region
      %72 = dma.done [#allocation3], 256
    $region25: #{tpu_custom_call.1} parent=1 // pred_fallthru
      _
    // Predicated region
    $region26: #{tpu_custom_call.1} parent=1 // pred_check
      _
    $region27: #{tpu_custom_call.1} parent=1 // pred_check_branch
      %74 = sbr.rel (0) target = $region29
    $region28: #{tpu_custom_call.1} parent=1 // pred_region
      %75 = dma.done [#allocation6], 576
    $region29: #{tpu_custom_call.1} parent=1 // pred_fallthru
      _
    // Predicated region
    $region30: #{tpu_custom_call.1} parent=1 // pred_check
      _
    $region31: #{tpu_custom_call.1} parent=1 // pred_check_branch
      %77 = sbr.rel (0) target = $region33
    $region32: #{tpu_custom_call.1} parent=1 // pred_region
      %78 = dma.done [#allocation6], 128
    $region33: #{tpu_custom_call.1} parent=1 // pred_fallthru
      _
    // Predicated region
    $region34: #{tpu_custom_call.1} parent=1 // pred_check
      _
    $region35: #{tpu_custom_call.1} parent=1 // pred_check_branch
      %80 = sbr.rel (0) target = $region37
    $region36: #{tpu_custom_call.1} parent=1 // pred_region
      %81 = dma.done [#allocation9], 192
    $region37: #{tpu_custom_call.1} parent=1 // pred_fallthru
      _
    // Predicated region
    $region38: #{tpu_custom_call.1} parent=1 // pred_check
      _
    $region39: #{tpu_custom_call.1} parent=1 // pred_check_branch
      %83 = sbr.rel (0) target = $region41
    $region40: #{tpu_custom_call.1} parent=1 // pred_region
      %84 = dma.done [#allocation9], 128
    $region41: #{tpu_custom_call.1} parent=1 // pred_fallthru
      _
    %v86 = vld [vmem:[#allocation2] sm:$0xff]
    %v87 = vld [vmem:[#allocation2 + $0x8] sm:$0xff]
    %v90 = vcombine.high %v86, %v86
    %v91 = vcombine.high %v87, %v87
    %94 = vrot.lane.b32.xlu0 %v86, 17
    %v95 = vpop.permute.xlu0 %94
    %96 = vrot.lane.b32.xlu0 %v90, 17
    %v97 = vpop.permute.xlu0 %96
    %98 = vrot.lane.b32.xlu0 %v87, 17
    %v99 = vpop.permute.xlu0 %98
    %100 = vrot.lane.b32.xlu0 %v91, 17
    %v101 = vpop.permute.xlu0 %100
    %v102 = vlaneseq
    %v103 = vand.u32 %v102, 127
    %vm104 = vcmp.lt.s32.totalorder %v103, 17
    %v105 = vsel %vm104, %v99, %v101
    %v106 = vsel %vm104, %v97, %v99
    %v107 = vsel %vm104, %v95, %v97
    %v108 = vsel %vm104, %v101, %v95
    %v109 = vld [vmem:[#allocation5] sm:$0xf]
    %v111 = vlaneseq
    %v112 = vshrl.u32 %v111, 7
    %v113 = vsub.s32 0, %v112
    %v114 = vrot.slane %v109, %v113
    %v115 = vlaneseq
    %v116 = vshrl.u32 %v115, 7
    %v117 = vsub.s32 1, %v116
    %v118 = vrot.slane %v109, %v117
    %v119 = vlaneseq
    %v120 = vshrl.u32 %v119, 7
    %v121 = vsub.s32 2, %v120
    %v122 = vrot.slane %v109, %v121
    %v123 = vlaneseq
    %v124 = vshrl.u32 %v123, 7
    %v125 = vsub.s32 3, %v124
    %v126 = vrot.slane %v109, %v125
    %v131 = vmul.f32 %v108, %v114
    %v132 = vmul.f32 %v107, %v118
    %v133 = vmul.f32 %v106, %v122
    %v134 = vmul.f32 %v105, %v126
    %135 = vrot.lane.b32.xlu0 %v86, 16
    %v136 = vpop.permute.xlu0 %135
    %137 = vrot.lane.b32.xlu0 %v90, 16
    %v138 = vpop.permute.xlu0 %137
    %139 = vrot.lane.b32.xlu0 %v87, 16
    %v140 = vpop.permute.xlu0 %139
    %141 = vrot.lane.b32.xlu0 %v91, 16
    %v142 = vpop.permute.xlu0 %141
    %vm143 = vcmp.lt.s32.totalorder %v103, 16
    %v144 = vsel %vm143, %v140, %v142
    %v145 = vsel %vm143, %v138, %v140
    %v146 = vsel %vm143, %v136, %v138
    %v147 = vsel %vm143, %v142, %v136
    %s148 = scalar_lea.vmem [#allocation5], 4
    %v149 = vld [vmem:[%s148] sm:$0xf]
    %v151 = vlaneseq
    %v152 = vshrl.u32 %v151, 7
    %v153 = vsub.s32 0, %v152
    %v154 = vrot.slane %v149, %v153
    %v155 = vlaneseq
    %v156 = vshrl.u32 %v155, 7
    %v157 = vsub.s32 1, %v156
    %v158 = vrot.slane %v149, %v157
    %v159 = vlaneseq
    %v160 = vshrl.u32 %v159, 7
    %v161 = vsub.s32 2, %v160
    %v162 = vrot.slane %v149, %v161
    %v163 = vlaneseq
    %v164 = vshrl.u32 %v163, 7
    %v165 = vsub.s32 3, %v164
    %v166 = vrot.slane %v149, %v165
    %v171 = vmul.f32 %v147, %v154
    %v172 = vmul.f32 %v146, %v158
    %v173 = vmul.f32 %v145, %v162
    %v174 = vmul.f32 %v144, %v166
    %175 = vrot.lane.b32.xlu0 %v86, 15
    %v176 = vpop.permute.xlu0 %175
    %177 = vrot.lane.b32.xlu0 %v90, 15
    %v178 = vpop.permute.xlu0 %177
    %179 = vrot.lane.b32.xlu0 %v87, 15
    %v180 = vpop.permute.xlu0 %179
    %181 = vrot.lane.b32.xlu0 %v91, 15
    %v182 = vpop.permute.xlu0 %181
    %vm183 = vcmp.lt.s32.totalorder %v103, 15
    %v184 = vsel %vm183, %v180, %v182
    %v185 = vsel %vm183, %v178, %v180
    %v186 = vsel %vm183, %v176, %v178
    %v187 = vsel %vm183, %v182, %v176
    %s188 = scalar_lea.vmem [#allocation5], 8
    %v189 = vld [vmem:[%s188] sm:$0xf]
    %v191 = vlaneseq
    %v192 = vshrl.u32 %v191, 7
    %v193 = vsub.s32 0, %v192
    %v194 = vrot.slane %v189, %v193
    %v195 = vlaneseq
    %v196 = vshrl.u32 %v195, 7
    %v197 = vsub.s32 1, %v196
    %v198 = vrot.slane %v189, %v197
    %v199 = vlaneseq
    %v200 = vshrl.u32 %v199, 7
    %v201 = vsub.s32 2, %v200
    %v202 = vrot.slane %v189, %v201
    %v203 = vlaneseq
    %v204 = vshrl.u32 %v203, 7
    %v205 = vsub.s32 3, %v204
    %v206 = vrot.slane %v189, %v205
    %v211 = vmul.f32 %v187, %v194
    %v212 = vmul.f32 %v186, %v198
    %v213 = vmul.f32 %v185, %v202
    %v214 = vmul.f32 %v184, %v206
    %215 = vrot.lane.b32.xlu0 %v86, 1
    %v216 = vpop.permute.xlu0 %215
    %217 = vrot.lane.b32.xlu0 %v90, 1
    %v218 = vpop.permute.xlu0 %217
    %219 = vrot.lane.b32.xlu0 %v87, 1
    %v220 = vpop.permute.xlu0 %219
    %221 = vrot.lane.b32.xlu0 %v91, 1
    %v222 = vpop.permute.xlu0 %221
    %vm223 = vcmp.lt.s32.totalorder %v103, 1
    %v224 = vsel %vm223, %v220, %v222
    %v225 = vsel %vm223, %v218, %v220
    %v226 = vsel %vm223, %v216, %v218
    %v227 = vsel %vm223, %v222, %v216
    %s228 = scalar_lea.vmem [#allocation5], 12
    %v229 = vld [vmem:[%s228] sm:$0xf]
    %v231 = vlaneseq
    %v232 = vshrl.u32 %v231, 7
    %v233 = vsub.s32 0, %v232
    %v234 = vrot.slane %v229, %v233
    %v235 = vlaneseq
    %v236 = vshrl.u32 %v235, 7
    %v237 = vsub.s32 1, %v236
    %v238 = vrot.slane %v229, %v237
    %v239 = vlaneseq
    %v240 = vshrl.u32 %v239, 7
    %v241 = vsub.s32 2, %v240
    %v242 = vrot.slane %v229, %v241
    %v243 = vlaneseq
    %v244 = vshrl.u32 %v243, 7
    %v245 = vsub.s32 3, %v244
    %v246 = vrot.slane %v229, %v245
    %v251 = vmul.f32 %v227, %v234
    %v252 = vmul.f32 %v226, %v238
    %v253 = vmul.f32 %v225, %v242
    %v254 = vmul.f32 %v224, %v246
    %255 = vrot.lane.b32.xlu0 %v86, 127
    %v256 = vpop.permute.xlu0 %255
    %257 = vrot.lane.b32.xlu0 %v90, 127
    %v258 = vpop.permute.xlu0 %257
    %259 = vrot.lane.b32.xlu0 %v87, 127
    %v260 = vpop.permute.xlu0 %259
    %261 = vrot.lane.b32.xlu0 %v91, 127
    %v262 = vpop.permute.xlu0 %261
    %vm263 = vcmp.lt.s32.totalorder %v103, 127
    %v264 = vsel %vm263, %v260, %v262
    %v265 = vsel %vm263, %v258, %v260
    %v266 = vsel %vm263, %v256, %v258
    %v267 = vsel %vm263, %v262, %v256
    %s268 = scalar_lea.vmem [#allocation5], 20
    %v269 = vld [vmem:[%s268] sm:$0xf]
    %v271 = vlaneseq
    %v272 = vshrl.u32 %v271, 7
    %v273 = vsub.s32 0, %v272
    %v274 = vrot.slane %v269, %v273
    %v275 = vlaneseq
    %v276 = vshrl.u32 %v275, 7
    %v277 = vsub.s32 1, %v276
    %v278 = vrot.slane %v269, %v277
    %v279 = vlaneseq
    %v280 = vshrl.u32 %v279, 7
    %v281 = vsub.s32 2, %v280
    %v282 = vrot.slane %v269, %v281
    %v283 = vlaneseq
    %v284 = vshrl.u32 %v283, 7
    %v285 = vsub.s32 3, %v284
    %v286 = vrot.slane %v269, %v285
    %v291 = vmul.f32 %v266, %v274
    %v292 = vmul.f32 %v265, %v278
    %v293 = vmul.f32 %v264, %v282
    %v294 = vmul.f32 %v267, %v286
    %295 = vrot.lane.b32.xlu0 %v86, 113
    %v296 = vpop.permute.xlu0 %295
    %297 = vrot.lane.b32.xlu0 %v90, 113
    %v298 = vpop.permute.xlu0 %297
    %299 = vrot.lane.b32.xlu0 %v87, 113
    %v300 = vpop.permute.xlu0 %299
    %301 = vrot.lane.b32.xlu0 %v91, 113
    %v302 = vpop.permute.xlu0 %301
    %vm303 = vcmp.lt.s32.totalorder %v103, 113
    %v304 = vsel %vm303, %v300, %v302
    %v305 = vsel %vm303, %v298, %v300
    %v306 = vsel %vm303, %v296, %v298
    %v307 = vsel %vm303, %v302, %v296
    %s308 = scalar_lea.vmem [#allocation5], 24
    %v309 = vld [vmem:[%s308] sm:$0xf]
    %v311 = vlaneseq
    %v312 = vshrl.u32 %v311, 7
    %v313 = vsub.s32 0, %v312
    %v314 = vrot.slane %v309, %v313
    %v315 = vlaneseq
    %v316 = vshrl.u32 %v315, 7
    %v317 = vsub.s32 1, %v316
    %v318 = vrot.slane %v309, %v317
    %v319 = vlaneseq
    %v320 = vshrl.u32 %v319, 7
    %v321 = vsub.s32 2, %v320
    %v322 = vrot.slane %v309, %v321
    %v323 = vlaneseq
    %v324 = vshrl.u32 %v323, 7
    %v325 = vsub.s32 3, %v324
    %v326 = vrot.slane %v309, %v325
    %v331 = vmul.f32 %v306, %v314
    %v332 = vmul.f32 %v305, %v318
    %v333 = vmul.f32 %v304, %v322
    %v334 = vmul.f32 %v307, %v326
    %335 = vrot.lane.b32.xlu0 %v86, 112
    %v336 = vpop.permute.xlu0 %335
    %337 = vrot.lane.b32.xlu0 %v90, 112
    %v338 = vpop.permute.xlu0 %337
    %339 = vrot.lane.b32.xlu0 %v87, 112
    %v340 = vpop.permute.xlu0 %339
    %341 = vrot.lane.b32.xlu0 %v91, 112
    %v342 = vpop.permute.xlu0 %341
    %vm343 = vcmp.lt.s32.totalorder %v103, 112
    %v344 = vsel %vm343, %v340, %v342
    %v345 = vsel %vm343, %v338, %v340
    %v346 = vsel %vm343, %v336, %v338
    %v347 = vsel %vm343, %v342, %v336
    %s348 = scalar_lea.vmem [#allocation5], 28
    %v349 = vld [vmem:[%s348] sm:$0xf]
    %v351 = vlaneseq
    %v352 = vshrl.u32 %v351, 7
    %v353 = vsub.s32 0, %v352
    %v354 = vrot.slane %v349, %v353
    %v355 = vlaneseq
    %v356 = vshrl.u32 %v355, 7
    %v357 = vsub.s32 1, %v356
    %v358 = vrot.slane %v349, %v357
    %v359 = vlaneseq
    %v360 = vshrl.u32 %v359, 7
    %v361 = vsub.s32 2, %v360
    %v362 = vrot.slane %v349, %v361
    %v363 = vlaneseq
    %v364 = vshrl.u32 %v363, 7
    %v365 = vsub.s32 3, %v364
    %v366 = vrot.slane %v349, %v365
    %v371 = vmul.f32 %v346, %v354
    %v372 = vmul.f32 %v345, %v358
    %v373 = vmul.f32 %v344, %v362
    %v374 = vmul.f32 %v347, %v366
    %375 = vrot.lane.b32.xlu0 %v86, 111
    %v376 = vpop.permute.xlu0 %375
    %377 = vrot.lane.b32.xlu0 %v90, 111
    %v378 = vpop.permute.xlu0 %377
    %379 = vrot.lane.b32.xlu0 %v87, 111
    %v380 = vpop.permute.xlu0 %379
    %381 = vrot.lane.b32.xlu0 %v91, 111
    %v382 = vpop.permute.xlu0 %381
    %vm383 = vcmp.lt.s32.totalorder %v103, 111
    %v384 = vsel %vm383, %v380, %v382
    %v385 = vsel %vm383, %v378, %v380
    %v386 = vsel %vm383, %v376, %v378
    %v387 = vsel %vm383, %v382, %v376
    %s388 = scalar_lea.vmem [#allocation5], 32
    %v389 = vld [vmem:[%s388] sm:$0xf]
    %v391 = vlaneseq
    %v392 = vshrl.u32 %v391, 7
    %v393 = vsub.s32 0, %v392
    %v394 = vrot.slane %v389, %v393
    %v395 = vlaneseq
    %v396 = vshrl.u32 %v395, 7
    %v397 = vsub.s32 1, %v396
    %v398 = vrot.slane %v389, %v397
    %v399 = vlaneseq
    %v400 = vshrl.u32 %v399, 7
    %v401 = vsub.s32 2, %v400
    %v402 = vrot.slane %v389, %v401
    %v403 = vlaneseq
    %v404 = vshrl.u32 %v403, 7
    %v405 = vsub.s32 3, %v404
    %v406 = vrot.slane %v389, %v405
    %v411 = vmul.f32 %v386, %v394
    %v412 = vmul.f32 %v385, %v398
    %v413 = vmul.f32 %v384, %v402
    %v414 = vmul.f32 %v387, %v406
    %s415 = scalar_lea.vmem [#allocation5], 16
    %v416 = vld [vmem:[%s415] sm:$0xf]
    %v421 = vrot.slane %v171, 4
    %v422 = vrot.slane %v172, 4
    %v423 = vrot.slane %v173, 4
    %v424 = vrot.slane %v174, 4
    %v433 = vrot.slane %v251, 4
    %v434 = vrot.slane %v252, 4
    %v435 = vrot.slane %v253, 4
    %v436 = vrot.slane %v254, 4
    %v445 = vrot.slane %v291, 4
    %v446 = vrot.slane %v292, 4
    %v447 = vrot.slane %v293, 4
    %v448 = vrot.slane %v294, 4
    %v457 = vrot.slane %v371, 4
    %v458 = vrot.slane %v372, 4
    %v459 = vrot.slane %v373, 4
    %v460 = vrot.slane %v374, 4
    %v466 = vlaneseq
    %v467 = vshrl.u32 %v466, 7
    %v468 = vsub.s32 0, %v467
    %v469 = vrot.slane %v416, %v468
    %v470 = vlaneseq
    %v471 = vshrl.u32 %v470, 7
    %v472 = vsub.s32 1, %v471
    %v473 = vrot.slane %v416, %v472
    %v474 = vlaneseq
    %v475 = vshrl.u32 %v474, 7
    %v476 = vsub.s32 2, %v475
    %v477 = vrot.slane %v416, %v476
    %v478 = vlaneseq
    %v479 = vshrl.u32 %v478, 7
    %v480 = vsub.s32 3, %v479
    %v481 = vrot.slane %v416, %v480
    %vm486 = vcmask 1043456
    %v487 = vsel %vm486, %v131, %v421
    %v488 = vsel %vm486, %v132, %v422
    %v489 = vsel %vm486, %v133, %v423
    %v490 = vsel %vm486, %v134, %v424
    %v491 = vsel %vm486, %v211, %v433
    %v492 = vsel %vm486, %v212, %v434
    %v493 = vsel %vm486, %v213, %v435
    %v494 = vsel %vm486, %v214, %v436
    %v495 = vsel %vm486, %v86, %v445
    %v496 = vsel %vm486, %v90, %v446
    %v497 = vsel %vm486, %v87, %v447
    %v498 = vsel %vm486, %v91, %v448
    %v499 = vsel %vm486, %v331, %v457
    %v500 = vsel %vm486, %v332, %v458
    %v501 = vsel %vm486, %v333, %v459
    %v502 = vsel %vm486, %v334, %v460
    %v503 = vsel %vm486, %v411, %v469
    %v504 = vsel %vm486, %v412, %v473
    %v505 = vsel %vm486, %v413, %v477
    %v506 = vsel %vm486, %v414, %v481
    %v507 = vpack.c.bf16 %v491, %v487
    %v508 = vpack.c.bf16 %v492, %v488
    %v509 = vpack.c.bf16 %v493, %v489
    %v510 = vpack.c.bf16 %v494, %v490
    %v511 = vpack.c.bf16 %v499, %v495
    %v512 = vpack.c.bf16 %v500, %v496
    %v513 = vpack.c.bf16 %v501, %v497
    %v514 = vpack.c.bf16 %v502, %v498
    %v515 = vpack.c.bf16 %v503, %v503
    %v516 = vpack.c.bf16 %v504, %v504
    %v517 = vpack.c.bf16 %v505, %v505
    %v518 = vpack.c.bf16 %v506, %v506
    %v519 = vld [vmem:[#allocation7] sm:$0xf]
    %v520 = vld [vmem:[#allocation7 + $0x4] sm:$0x1]
    %v523 = vunpack.c.l.b16 %v519
    %v524 = vunpack.c.l.b16 %v520
    %v525 = vpack.c.b16 %v524, %v523
    %vm526 = vcmask 302080
    %v528 = vsel %vm526, %v525, 0
    %vm530 = vcmask 1041408
    %vm531 = vcmask 1042432
    %v532 = vsel %vm530, 4294967295, 65535
    %v533 = vsel %vm531, %v532, 0
    %v535 = vand.u32 %v515, %v533
    %v538 = vand.u32 %v516, %v533
    %v541 = vand.u32 %v517, %v533
    %v544 = vand.u32 %v518, %v533
    %546 = vmatprep.subr.bf16.mxu0 0
    %547 = vmatpush1.bf16.msra.mxu0 0
    %548 = vmatprep.subr.bf16.mxu0 0
    %549 = vmatpush1.bf16.msra.mxu0 0
    %550 = vmatprep.subr.bf16.mxu0 0
    %551 = vmatpush1.bf16.msra.mxu0 0
    %552 = vmatprep.subr.bf16.mxu0 0
    %553 = vmatpush1.bf16.msra.mxu0 0
    %554 = vmatprep.subr.bf16.mxu0 0
    %555 = vmatpush1.bf16.msra.mxu0 0
    %556 = vmatprep.subr.bf16.mxu0 %v538
    %557 = vmatpush1.bf16.msra.mxu0 %v535
    %558 = vmatprep.subr.bf16.mxu0 %v512
    %559 = vmatpush1.bf16.msra.mxu0 %v511
    %560 = vmatprep.subr.bf16.mxu0 %v508
    %561 = vmatpush1.bf16.msra.mxu0 %v507
    %562 = vmatprep.subr.bf16.mxu0 0
    %563 = vmatpush2.bf16.msra.mxu0 0
    %564 = vmatprep.subr.bf16.mxu0 0
    %565 = vmatpush2.bf16.msra.mxu0 0
    %566 = vmatprep.subr.bf16.mxu0 0
    %567 = vmatpush2.bf16.msra.mxu0 0
    %568 = vmatprep.subr.bf16.mxu0 0
    %569 = vmatpush2.bf16.msra.mxu0 0
    %570 = vmatprep.subr.bf16.mxu0 0
    %571 = vmatpush2.bf16.msra.mxu0 0
    %572 = vmatprep.subr.bf16.mxu0 0
    %573 = vmatpush2.bf16.msra.mxu0 0
    %574 = vmatprep.subr.bf16.mxu0 0
    %575 = vmatpush2.bf16.msra.mxu0 0
    %576 = vmatprep.subr.bf16.mxu0 0
    %577 = vmatpush2.bf16.msra.mxu0 0
    %578 = vmatprep.mubr.bf16.mxu0 0
    %579 = vmatmul.mubr.bf16.gmra.mxu0 %v528
    %v580 = vpop.f32.mrf.mxu0
    %v581 = vadd.f32 0.0, %v580
    %v582 = vpop.f32.mrf.mxu0
    %v583 = vadd.f32 0.0, %v582
    %v584 = vpop.f32.mrf.mxu0
    %v585 = vadd.f32 0.0, %v584
    %v586 = vpop.f32.mrf.mxu0
    %v587 = vadd.f32 0.0, %v586
    %588 = vdwg.mxu0
    %589 = vmatprep.subr.bf16.mxu0 0
    %590 = vmatpush1.bf16.msra.mxu0 0
    %591 = vmatprep.subr.bf16.mxu0 0
    %592 = vmatpush1.bf16.msra.mxu0 0
    %593 = vmatprep.subr.bf16.mxu0 0
    %594 = vmatpush1.bf16.msra.mxu0 0
    %595 = vmatprep.subr.bf16.mxu0 0
    %596 = vmatpush1.bf16.msra.mxu0 0
    %597 = vmatprep.subr.bf16.mxu0 0
    %598 = vmatpush1.bf16.msra.mxu0 0
    %599 = vmatprep.subr.bf16.mxu0 %v544
    %600 = vmatpush1.bf16.msra.mxu0 %v541
    %601 = vmatprep.subr.bf16.mxu0 %v514
    %602 = vmatpush1.bf16.msra.mxu0 %v513
    %603 = vmatprep.subr.bf16.mxu0 %v510
    %604 = vmatpush1.bf16.msra.mxu0 %v509
    %605 = vmatprep.subr.bf16.mxu0 0
    %606 = vmatpush2.bf16.msra.mxu0 0
    %607 = vmatprep.subr.bf16.mxu0 0
    %608 = vmatpush2.bf16.msra.mxu0 0
    %609 = vmatprep.subr.bf16.mxu0 0
    %610 = vmatpush2.bf16.msra.mxu0 0
    %611 = vmatprep.subr.bf16.mxu0 0
    %612 = vmatpush2.bf16.msra.mxu0 0
    %613 = vmatprep.subr.bf16.mxu0 0
    %614 = vmatpush2.bf16.msra.mxu0 0
    %615 = vmatprep.subr.bf16.mxu0 0
    %616 = vmatpush2.bf16.msra.mxu0 0
    %617 = vmatprep.subr.bf16.mxu0 0
    %618 = vmatpush2.bf16.msra.mxu0 0
    %619 = vmatprep.subr.bf16.mxu0 0
    %620 = vmatpush2.bf16.msra.mxu0 0
    %621 = vmatprep.mubr.bf16.mxu0 0
    %622 = vmatmul.mubr.bf16.gmra.mxu0 %v528
    %v623 = vpop.f32.mrf.mxu0
    %v624 = vadd.f32 0.0, %v623
    %v625 = vpop.f32.mrf.mxu0
    %v626 = vadd.f32 0.0, %v625
    %v627 = vpop.f32.mrf.mxu0
    %v628 = vadd.f32 0.0, %v627
    %v629 = vpop.f32.mrf.mxu0
    %v630 = vadd.f32 0.0, %v629
    %631 = vdwg.mxu0
    %v632 = vmax.f32 %v581, 0.0
    %v633 = vmax.f32 %v583, 0.0
    %v634 = vmax.f32 %v624, 0.0
    %v635 = vmax.f32 %v626, 0.0
    %v636 = vmax.f32 %v585, 0.0
    %v637 = vmax.f32 %v587, 0.0
    %v638 = vmax.f32 %v628, 0.0
    %v639 = vmax.f32 %v630, 0.0
    %640 = vrot.lane.b32.xlu0 %v632, 17
    %v641 = vpop.permute.xlu0 %640
    %642 = vrot.lane.b32.xlu0 %v636, 17
    %v643 = vpop.permute.xlu0 %642
    %644 = vrot.lane.b32.xlu0 %v633, 17
    %v645 = vpop.permute.xlu0 %644
    %646 = vrot.lane.b32.xlu0 %v637, 17
    %v647 = vpop.permute.xlu0 %646
    %648 = vrot.lane.b32.xlu0 %v634, 17
    %v649 = vpop.permute.xlu0 %648
    %650 = vrot.lane.b32.xlu0 %v638, 17
    %v651 = vpop.permute.xlu0 %650
    %652 = vrot.lane.b32.xlu0 %v635, 17
    %v653 = vpop.permute.xlu0 %652
    %654 = vrot.lane.b32.xlu0 %v639, 17
    %v655 = vpop.permute.xlu0 %654
    %v656 = vsel %vm104, %v649, %v653
    %v657 = vsel %vm104, %v651, %v655
    %v658 = vsel %vm104, %v645, %v649
    %v659 = vsel %vm104, %v647, %v651
    %v660 = vsel %vm104, %v641, %v645
    %v661 = vsel %vm104, %v643, %v647
    %v662 = vsel %vm104, %v653, %v641
    %v663 = vsel %vm104, %v655, %v643
    %v664 = vmul.f32 %v662, %v114
    %v665 = vmul.f32 %v660, %v118
    %v666 = vmul.f32 %v658, %v122
    %v667 = vmul.f32 %v656, %v126
    %v668 = vmul.f32 %v663, %v114
    %v669 = vmul.f32 %v661, %v118
    %v670 = vmul.f32 %v659, %v122
    %v671 = vmul.f32 %v657, %v126
    %672 = vrot.lane.b32.xlu0 %v632, 16
    %v673 = vpop.permute.xlu0 %672
    %674 = vrot.lane.b32.xlu0 %v636, 16
    %v675 = vpop.permute.xlu0 %674
    %676 = vrot.lane.b32.xlu0 %v633, 16
    %v677 = vpop.permute.xlu0 %676
    %678 = vrot.lane.b32.xlu0 %v637, 16
    %v679 = vpop.permute.xlu0 %678
    %680 = vrot.lane.b32.xlu0 %v634, 16
    %v681 = vpop.permute.xlu0 %680
    %682 = vrot.lane.b32.xlu0 %v638, 16
    %v683 = vpop.permute.xlu0 %682
    %684 = vrot.lane.b32.xlu0 %v635, 16
    %v685 = vpop.permute.xlu0 %684
    %686 = vrot.lane.b32.xlu0 %v639, 16
    %v687 = vpop.permute.xlu0 %686
    %v688 = vsel %vm143, %v681, %v685
    %v689 = vsel %vm143, %v683, %v687
    %v690 = vsel %vm143, %v677, %v681
    %v691 = vsel %vm143, %v679, %v683
    %v692 = vsel %vm143, %v673, %v677
    %v693 = vsel %vm143, %v675, %v679
    %v694 = vsel %vm143, %v685, %v673
    %v695 = vsel %vm143, %v687, %v675
    %v696 = vmul.f32 %v694, %v154
    %v697 = vmul.f32 %v692, %v158
    %v698 = vmul.f32 %v690, %v162
    %v699 = vmul.f32 %v688, %v166
    %v700 = vmul.f32 %v695, %v154
    %v701 = vmul.f32 %v693, %v158
    %v702 = vmul.f32 %v691, %v162
    %v703 = vmul.f32 %v689, %v166
    %704 = vrot.lane.b32.xlu0 %v632, 15
    %v705 = vpop.permute.xlu0 %704
    %706 = vrot.lane.b32.xlu0 %v636, 15
    %v707 = vpop.permute.xlu0 %706
    %708 = vrot.lane.b32.xlu0 %v633, 15
    %v709 = vpop.permute.xlu0 %708
    %710 = vrot.lane.b32.xlu0 %v637, 15
    %v711 = vpop.permute.xlu0 %710
    %712 = vrot.lane.b32.xlu0 %v634, 15
    %v713 = vpop.permute.xlu0 %712
    %714 = vrot.lane.b32.xlu0 %v638, 15
    %v715 = vpop.permute.xlu0 %714
    %716 = vrot.lane.b32.xlu0 %v635, 15
    %v717 = vpop.permute.xlu0 %716
    %718 = vrot.lane.b32.xlu0 %v639, 15
    %v719 = vpop.permute.xlu0 %718
    %v720 = vsel %vm183, %v713, %v717
    %v721 = vsel %vm183, %v715, %v719
    %v722 = vsel %vm183, %v709, %v713
    %v723 = vsel %vm183, %v711, %v715
    %v724 = vsel %vm183, %v705, %v709
    %v725 = vsel %vm183, %v707, %v711
    %v726 = vsel %vm183, %v717, %v705
    %v727 = vsel %vm183, %v719, %v707
    %v728 = vmul.f32 %v726, %v194
    %v729 = vmul.f32 %v724, %v198
    %v730 = vmul.f32 %v722, %v202
    %v731 = vmul.f32 %v720, %v206
    %v732 = vmul.f32 %v727, %v194
    %v733 = vmul.f32 %v725, %v198
    %v734 = vmul.f32 %v723, %v202
    %v735 = vmul.f32 %v721, %v206
    %736 = vrot.lane.b32.xlu0 %v632, 1
    %v737 = vpop.permute.xlu0 %736
    %738 = vrot.lane.b32.xlu0 %v636, 1
    %v739 = vpop.permute.xlu0 %738
    %740 = vrot.lane.b32.xlu0 %v633, 1
    %v741 = vpop.permute.xlu0 %740
    %742 = vrot.lane.b32.xlu0 %v637, 1
    %v743 = vpop.permute.xlu0 %742
    %744 = vrot.lane.b32.xlu0 %v634, 1
    %v745 = vpop.permute.xlu0 %744
    %746 = vrot.lane.b32.xlu0 %v638, 1
    %v747 = vpop.permute.xlu0 %746
    %748 = vrot.lane.b32.xlu0 %v635, 1
    %v749 = vpop.permute.xlu0 %748
    %750 = vrot.lane.b32.xlu0 %v639, 1
    %v751 = vpop.permute.xlu0 %750
    %v752 = vsel %vm223, %v745, %v749
    %v753 = vsel %vm223, %v747, %v751
    %v754 = vsel %vm223, %v741, %v745
    %v755 = vsel %vm223, %v743, %v747
    %v756 = vsel %vm223, %v737, %v741
    %v757 = vsel %vm223, %v739, %v743
    %v758 = vsel %vm223, %v749, %v737
    %v759 = vsel %vm223, %v751, %v739
    %v760 = vmul.f32 %v758, %v234
    %v761 = vmul.f32 %v756, %v238
    %v762 = vmul.f32 %v754, %v242
    %v763 = vmul.f32 %v752, %v246
    %v764 = vmul.f32 %v759, %v234
    %v765 = vmul.f32 %v757, %v238
    %v766 = vmul.f32 %v755, %v242
    %v767 = vmul.f32 %v753, %v246
    %768 = vrot.lane.b32.xlu0 %v632, 127
    %v769 = vpop.permute.xlu0 %768
    %770 = vrot.lane.b32.xlu0 %v636, 127
    %v771 = vpop.permute.xlu0 %770
    %772 = vrot.lane.b32.xlu0 %v633, 127
    %v773 = vpop.permute.xlu0 %772
    %774 = vrot.lane.b32.xlu0 %v637, 127
    %v775 = vpop.permute.xlu0 %774
    %776 = vrot.lane.b32.xlu0 %v634, 127
    %v777 = vpop.permute.xlu0 %776
    %778 = vrot.lane.b32.xlu0 %v638, 127
    %v779 = vpop.permute.xlu0 %778
    %780 = vrot.lane.b32.xlu0 %v635, 127
    %v781 = vpop.permute.xlu0 %780
    %782 = vrot.lane.b32.xlu0 %v639, 127
    %v783 = vpop.permute.xlu0 %782
    %v784 = vsel %vm263, %v777, %v781
    %v785 = vsel %vm263, %v779, %v783
    %v786 = vsel %vm263, %v773, %v777
    %v787 = vsel %vm263, %v775, %v779
    %v788 = vsel %vm263, %v769, %v773
    %v789 = vsel %vm263, %v771, %v775
    %v790 = vsel %vm263, %v781, %v769
    %v791 = vsel %vm263, %v783, %v771
    %v792 = vmul.f32 %v788, %v274
    %v793 = vmul.f32 %v786, %v278
    %v794 = vmul.f32 %v784, %v282
    %v795 = vmul.f32 %v790, %v286
    %v796 = vmul.f32 %v789, %v274
    %v797 = vmul.f32 %v787, %v278
    %v798 = vmul.f32 %v785, %v282
    %v799 = vmul.f32 %v791, %v286
    %800 = vrot.lane.b32.xlu0 %v632, 113
    %v801 = vpop.permute.xlu0 %800
    %802 = vrot.lane.b32.xlu0 %v636, 113
    %v803 = vpop.permute.xlu0 %802
    %804 = vrot.lane.b32.xlu0 %v633, 113
    %v805 = vpop.permute.xlu0 %804
    %806 = vrot.lane.b32.xlu0 %v637, 113
    %v807 = vpop.permute.xlu0 %806
    %808 = vrot.lane.b32.xlu0 %v634, 113
    %v809 = vpop.permute.xlu0 %808
    %810 = vrot.lane.b32.xlu0 %v638, 113
    %v811 = vpop.permute.xlu0 %810
    %812 = vrot.lane.b32.xlu0 %v635, 113
    %v813 = vpop.permute.xlu0 %812
    %814 = vrot.lane.b32.xlu0 %v639, 113
    %v815 = vpop.permute.xlu0 %814
    %v816 = vsel %vm303, %v809, %v813
    %v817 = vsel %vm303, %v811, %v815
    %v818 = vsel %vm303, %v805, %v809
    %v819 = vsel %vm303, %v807, %v811
    %v820 = vsel %vm303, %v801, %v805
    %v821 = vsel %vm303, %v803, %v807
    %v822 = vsel %vm303, %v813, %v801
    %v823 = vsel %vm303, %v815, %v803
    %v824 = vmul.f32 %v820, %v314
    %v825 = vmul.f32 %v818, %v318
    %v826 = vmul.f32 %v816, %v322
    %v827 = vmul.f32 %v822, %v326
    %v828 = vmul.f32 %v821, %v314
    %v829 = vmul.f32 %v819, %v318
    %v830 = vmul.f32 %v817, %v322
    %v831 = vmul.f32 %v823, %v326
    %832 = vrot.lane.b32.xlu0 %v632, 112
    %v833 = vpop.permute.xlu0 %832
    %834 = vrot.lane.b32.xlu0 %v636, 112
    %v835 = vpop.permute.xlu0 %834
    %836 = vrot.lane.b32.xlu0 %v633, 112
    %v837 = vpop.permute.xlu0 %836
    %838 = vrot.lane.b32.xlu0 %v637, 112
    %v839 = vpop.permute.xlu0 %838
    %840 = vrot.lane.b32.xlu0 %v634, 112
    %v841 = vpop.permute.xlu0 %840
    %842 = vrot.lane.b32.xlu0 %v638, 112
    %v843 = vpop.permute.xlu0 %842
    %844 = vrot.lane.b32.xlu0 %v635, 112
    %v845 = vpop.permute.xlu0 %844
    %846 = vrot.lane.b32.xlu0 %v639, 112
    %v847 = vpop.permute.xlu0 %846
    %v848 = vsel %vm343, %v841, %v845
    %v849 = vsel %vm343, %v843, %v847
    %v850 = vsel %vm343, %v837, %v841
    %v851 = vsel %vm343, %v839, %v843
    %v852 = vsel %vm343, %v833, %v837
    %v853 = vsel %vm343, %v835, %v839
    %v854 = vsel %vm343, %v845, %v833
    %v855 = vsel %vm343, %v847, %v835
    %v856 = vmul.f32 %v852, %v354
    %v857 = vmul.f32 %v850, %v358
    %v858 = vmul.f32 %v848, %v362
    %v859 = vmul.f32 %v854, %v366
    %v860 = vmul.f32 %v853, %v354
    %v861 = vmul.f32 %v851, %v358
    %v862 = vmul.f32 %v849, %v362
    %v863 = vmul.f32 %v855, %v366
    %864 = vrot.lane.b32.xlu0 %v632, 111
    %v865 = vpop.permute.xlu0 %864
    %866 = vrot.lane.b32.xlu0 %v636, 111
    %v867 = vpop.permute.xlu0 %866
    %868 = vrot.lane.b32.xlu0 %v633, 111
    %v869 = vpop.permute.xlu0 %868
    %870 = vrot.lane.b32.xlu0 %v637, 111
    %v871 = vpop.permute.xlu0 %870
    %872 = vrot.lane.b32.xlu0 %v634, 111
    %v873 = vpop.permute.xlu0 %872
    %874 = vrot.lane.b32.xlu0 %v638, 111
    %v875 = vpop.permute.xlu0 %874
    %876 = vrot.lane.b32.xlu0 %v635, 111
    %v877 = vpop.permute.xlu0 %876
    %878 = vrot.lane.b32.xlu0 %v639, 111
    %v879 = vpop.permute.xlu0 %878
    %v880 = vsel %vm383, %v873, %v877
    %v881 = vsel %vm383, %v875, %v879
    %v882 = vsel %vm383, %v869, %v873
    %v883 = vsel %vm383, %v871, %v875
    %v884 = vsel %vm383, %v865, %v869
    %v885 = vsel %vm383, %v867, %v871
    %v886 = vsel %vm383, %v877, %v865
    %v887 = vsel %vm383, %v879, %v867
    %v888 = vmul.f32 %v884, %v394
    %v889 = vmul.f32 %v882, %v398
    %v890 = vmul.f32 %v880, %v402
    %v891 = vmul.f32 %v886, %v406
    %v892 = vmul.f32 %v885, %v394
    %v893 = vmul.f32 %v883, %v398
    %v894 = vmul.f32 %v881, %v402
    %v895 = vmul.f32 %v887, %v406
    %v904 = vrot.slane %v696, 6
    %v905 = vrot.slane %v697, 6
    %v906 = vrot.slane %v698, 6
    %v907 = vrot.slane %v699, 6
    %v908 = vrot.slane %v700, 6
    %v909 = vsel %vm530, %v904, %v908
    %v910 = vrot.slane %v701, 6
    %v911 = vsel %vm530, %v905, %v910
    %v912 = vrot.slane %v702, 6
    %v913 = vsel %vm530, %v906, %v912
    %v914 = vrot.slane %v703, 6
    %v915 = vsel %vm530, %v907, %v914
    %v932 = vrot.slane %v728, 4
    %v933 = vrot.slane %v729, 4
    %v934 = vrot.slane %v730, 4
    %v935 = vrot.slane %v731, 4
    %v936 = vrot.slane %v732, 4
    %v937 = vsel %vm486, %v932, %v936
    %v938 = vrot.slane %v733, 4
    %v939 = vsel %vm486, %v933, %v938
    %v940 = vrot.slane %v734, 4
    %v941 = vsel %vm486, %v934, %v940
    %v942 = vrot.slane %v735, 4
    %v943 = vsel %vm486, %v935, %v942
    %vm960 = vcmask 1045504
    %v961 = vrot.slane %v760, 2
    %v962 = vrot.slane %v761, 2
    %v963 = vrot.slane %v762, 2
    %v964 = vrot.slane %v763, 2
    %v965 = vrot.slane %v764, 2
    %v966 = vsel %vm960, %v961, %v965
    %v967 = vrot.slane %v765, 2
    %v968 = vsel %vm960, %v962, %v967
    %v969 = vrot.slane %v766, 2
    %v970 = vsel %vm960, %v963, %v969
    %v971 = vrot.slane %v767, 2
    %v972 = vsel %vm960, %v964, %v971
    %v989 = vrot.slane %v792, 6
    %v990 = vrot.slane %v793, 6
    %v991 = vrot.slane %v794, 6
    %v992 = vrot.slane %v795, 6
    %v993 = vrot.slane %v796, 6
    %v994 = vsel %vm530, %v989, %v993
    %v995 = vrot.slane %v797, 6
    %v996 = vsel %vm530, %v990, %v995
    %v997 = vrot.slane %v798, 6
    %v998 = vsel %vm530, %v991, %v997
    %v999 = vrot.slane %v799, 6
    %v1000 = vsel %vm530, %v992, %v999
    %v1017 = vrot.slane %v824, 4
    %v1018 = vrot.slane %v825, 4
    %v1019 = vrot.slane %v826, 4
    %v1020 = vrot.slane %v827, 4
    %v1021 = vrot.slane %v828, 4
    %v1022 = vsel %vm486, %v1017, %v1021
    %v1023 = vrot.slane %v829, 4
    %v1024 = vsel %vm486, %v1018, %v1023
    %v1025 = vrot.slane %v830, 4
    %v1026 = vsel %vm486, %v1019, %v1025
    %v1027 = vrot.slane %v831, 4
    %v1028 = vsel %vm486, %v1020, %v1027
    %v1045 = vrot.slane %v856, 2
    %v1046 = vrot.slane %v857, 2
    %v1047 = vrot.slane %v858, 2
    %v1048 = vrot.slane %v859, 2
    %v1049 = vrot.slane %v860, 2
    %v1050 = vsel %vm960, %v1045, %v1049
    %v1051 = vrot.slane %v861, 2
    %v1052 = vsel %vm960, %v1046, %v1051
    %v1053 = vrot.slane %v862, 2
    %v1054 = vsel %vm960, %v1047, %v1053
    %v1055 = vrot.slane %v863, 2
    %v1056 = vsel %vm960, %v1048, %v1055
    %v1065 = vsel %vm530, %v668, %v904
    %v1066 = vsel %vm530, %v669, %v905
    %v1067 = vsel %vm530, %v670, %v906
    %v1068 = vsel %vm530, %v671, %v907
    %v1069 = vsel %vm486, %v909, %v932
    %v1070 = vsel %vm486, %v911, %v933
    %v1071 = vsel %vm486, %v913, %v934
    %v1072 = vsel %vm486, %v915, %v935
    %v1073 = vsel %vm960, %v937, %v961
    %v1074 = vsel %vm960, %v939, %v962
    %v1075 = vsel %vm960, %v941, %v963
    %v1076 = vsel %vm960, %v943, %v964
    %v1077 = vsel %vm530, %v636, %v989
    %v1078 = vsel %vm530, %v637, %v990
    %v1079 = vsel %vm530, %v638, %v991
    %v1080 = vsel %vm530, %v639, %v992
    %v1081 = vsel %vm486, %v994, %v1017
    %v1082 = vsel %vm486, %v996, %v1018
    %v1083 = vsel %vm486, %v998, %v1019
    %v1084 = vsel %vm486, %v1000, %v1020
    %v1085 = vsel %vm960, %v1022, %v1045
    %v1086 = vsel %vm960, %v1024, %v1046
    %v1087 = vsel %vm960, %v1026, %v1047
    %v1088 = vsel %vm960, %v1028, %v1048
    %v1089 = vsel %vm530, %v892, %v469
    %v1090 = vsel %vm530, %v893, %v473
    %v1091 = vsel %vm530, %v894, %v477
    %v1092 = vsel %vm530, %v895, %v481
    %v1093 = vpack.c.bf16 %v1065, %v664
    %v1094 = vpack.c.bf16 %v1066, %v665
    %v1095 = vpack.c.bf16 %v1067, %v666
    %v1096 = vpack.c.bf16 %v1068, %v667
    %v1097 = vpack.c.bf16 %v1073, %v1069
    %v1098 = vpack.c.bf16 %v1074, %v1070
    %v1099 = vpack.c.bf16 %v1075, %v1071
    %v1100 = vpack.c.bf16 %v1076, %v1072
    %v1101 = vpack.c.bf16 %v632, %v966
    %v1102 = vpack.c.bf16 %v633, %v968
    %v1103 = vpack.c.bf16 %v634, %v970
    %v1104 = vpack.c.bf16 %v635, %v972
    %v1105 = vpack.c.bf16 %v1081, %v1077
    %v1106 = vpack.c.bf16 %v1082, %v1078
    %v1107 = vpack.c.bf16 %v1083, %v1079
    %v1108 = vpack.c.bf16 %v1084, %v1080
    %v1109 = vpack.c.bf16 %v1050, %v1085
    %v1110 = vpack.c.bf16 %v1052, %v1086
    %v1111 = vpack.c.bf16 %v1054, %v1087
    %v1112 = vpack.c.bf16 %v1056, %v1088
    %v1113 = vpack.c.bf16 %v1089, %v888
    %v1114 = vpack.c.bf16 %v1090, %v889
    %v1115 = vpack.c.bf16 %v1091, %v890
    %v1116 = vpack.c.bf16 %v1092, %v891
    %v1117 = vld [vmem:[#allocation8] sm:$0xf]
    %v1118 = vld [vmem:[#allocation8 + $0x4] sm:$0xf]
    %v1119 = vld [vmem:[#allocation8 + $0x8] sm:$0x3]
    %v1123 = vunpack.c.l.b16 %v1117
    %v1124 = vunpack.c.l.b16 %v1118
    %v1125 = vunpack.c.l.b16 %v1119
    %v1126 = vpack.c.b16 %v1124, %v1123
    %v1127 = vpack.c.b16 %v1125, %v1125
    %vm1128 = vcmask 744448
    %v1130 = vsel %vm1128, %v1126, 0
    %v1133 = vsel %vm1128, %v1127, 0
    %vm1135 = vcmask 1044480
    %v1136 = vsel %vm1135, 4294967295, 65535
    %v1137 = vsel %vm960, %v1136, 0
    %v1139 = vand.u32 %v1113, %v1137
    %v1142 = vand.u32 %v1114, %v1137
    %v1145 = vand.u32 %v1115, %v1137
    %v1148 = vand.u32 %v1116, %v1137
    %1150 = vmatprep.subr.bf16.mxu0 0
    %1151 = vmatpush1.bf16.msra.mxu0 0
    %1152 = vmatprep.subr.bf16.mxu0 0
    %1153 = vmatpush1.bf16.msra.mxu0 0
    %1154 = vmatprep.subr.bf16.mxu0 %v1142
    %1155 = vmatpush1.bf16.msra.mxu0 %v1139
    %1156 = vmatprep.subr.bf16.mxu0 %v1110
    %1157 = vmatpush1.bf16.msra.mxu0 %v1109
    %1158 = vmatprep.subr.bf16.mxu0 %v1106
    %1159 = vmatpush1.bf16.msra.mxu0 %v1105
    %1160 = vmatprep.subr.bf16.mxu0 %v1102
    %1161 = vmatpush1.bf16.msra.mxu0 %v1101
    %1162 = vmatprep.subr.bf16.mxu0 %v1098
    %1163 = vmatpush1.bf16.msra.mxu0 %v1097
    %1164 = vmatprep.subr.bf16.mxu0 %v1094
    %1165 = vmatpush1.bf16.msra.mxu0 %v1093
    %1166 = vmatprep.subr.bf16.mxu0 0
    %1167 = vmatpush2.bf16.msra.mxu0 0
    %1168 = vmatprep.subr.bf16.mxu0 0
    %1169 = vmatpush2.bf16.msra.mxu0 0
    %1170 = vmatprep.subr.bf16.mxu0 0
    %1171 = vmatpush2.bf16.msra.mxu0 0
    %1172 = vmatprep.subr.bf16.mxu0 0
    %1173 = vmatpush2.bf16.msra.mxu0 0
    %1174 = vmatprep.subr.bf16.mxu0 0
    %1175 = vmatpush2.bf16.msra.mxu0 0
    %1176 = vmatprep.subr.bf16.mxu0 0
    %1177 = vmatpush2.bf16.msra.mxu0 0
    %1178 = vmatprep.subr.bf16.mxu0 0
    %1179 = vmatpush2.bf16.msra.mxu0 0
    %1180 = vmatprep.subr.bf16.mxu0 0
    %1181 = vmatpush2.bf16.msra.mxu0 0
    %1182 = vmatprep.mubr.bf16.mxu0 0
    %1183 = vmatmul.mubr.bf16.gmra.mxu0 %v1130
    %v1184 = vpop.f32.mrf.mxu0
    %v1185 = vadd.f32 0.0, %v1184
    %v1186 = vpop.f32.mrf.mxu0
    %v1187 = vadd.f32 0.0, %v1186
    %v1188 = vpop.f32.mrf.mxu0
    %v1189 = vadd.f32 0.0, %v1188
    %v1190 = vpop.f32.mrf.mxu0
    %v1191 = vadd.f32 0.0, %v1190
    %1192 = vmatprep.mubr.bf16.mxu0 0
    %1193 = vmatmul.mubr.bf16.gmra.mxu0 %v1133
    %v1194 = vpop.f32.mrf.mxu0
    %v1195 = vadd.f32 0.0, %v1194
    %v1196 = vpop.f32.mrf.mxu0
    %v1197 = vadd.f32 0.0, %v1196
    %v1198 = vpop.f32.mrf.mxu0
    %v1199 = vpop.f32.mrf.mxu0
    %1200 = vdwg.mxu0
    %1201 = vmatprep.subr.bf16.mxu0 0
    %1202 = vmatpush1.bf16.msra.mxu0 0
    %1203 = vmatprep.subr.bf16.mxu0 0
    %1204 = vmatpush1.bf16.msra.mxu0 0
    %1205 = vmatprep.subr.bf16.mxu0 %v1148
    %1206 = vmatpush1.bf16.msra.mxu0 %v1145
    %1207 = vmatprep.subr.bf16.mxu0 %v1112
    %1208 = vmatpush1.bf16.msra.mxu0 %v1111
    %1209 = vmatprep.subr.bf16.mxu0 %v1108
    %1210 = vmatpush1.bf16.msra.mxu0 %v1107
    %1211 = vmatprep.subr.bf16.mxu0 %v1104
    %1212 = vmatpush1.bf16.msra.mxu0 %v1103
    %1213 = vmatprep.subr.bf16.mxu0 %v1100
    %1214 = vmatpush1.bf16.msra.mxu0 %v1099
    %1215 = vmatprep.subr.bf16.mxu0 %v1096
    %1216 = vmatpush1.bf16.msra.mxu0 %v1095
    %1217 = vmatprep.subr.bf16.mxu0 0
    %1218 = vmatpush2.bf16.msra.mxu0 0
    %1219 = vmatprep.subr.bf16.mxu0 0
    %1220 = vmatpush2.bf16.msra.mxu0 0
    %1221 = vmatprep.subr.bf16.mxu0 0
    %1222 = vmatpush2.bf16.msra.mxu0 0
    %1223 = vmatprep.subr.bf16.mxu0 0
    %1224 = vmatpush2.bf16.msra.mxu0 0
    %1225 = vmatprep.subr.bf16.mxu0 0
    %1226 = vmatpush2.bf16.msra.mxu0 0
    %1227 = vmatprep.subr.bf16.mxu0 0
    %1228 = vmatpush2.bf16.msra.mxu0 0
    %1229 = vmatprep.subr.bf16.mxu0 0
    %1230 = vmatpush2.bf16.msra.mxu0 0
    %1231 = vmatprep.subr.bf16.mxu0 0
    %1232 = vmatpush2.bf16.msra.mxu0 0
    %1233 = vmatprep.mubr.bf16.mxu0 0
    %1234 = vmatmul.mubr.bf16.gmra.mxu0 %v1130
    %v1235 = vpop.f32.mrf.mxu0
    %v1236 = vadd.f32 0.0, %v1235
    %v1237 = vpop.f32.mrf.mxu0
    %v1238 = vadd.f32 0.0, %v1237
    %v1239 = vpop.f32.mrf.mxu0
    %v1240 = vadd.f32 0.0, %v1239
    %v1241 = vpop.f32.mrf.mxu0
    %v1242 = vadd.f32 0.0, %v1241
    %1243 = vmatprep.mubr.bf16.mxu0 0
    %1244 = vmatmul.mubr.bf16.gmra.mxu0 %v1133
    %v1245 = vpop.f32.mrf.mxu0
    %v1246 = vadd.f32 0.0, %v1245
    %v1247 = vpop.f32.mrf.mxu0
    %v1248 = vadd.f32 0.0, %v1247
    %v1249 = vpop.f32.mrf.mxu0
    %v1250 = vpop.f32.mrf.mxu0
    %1251 = vdwg.mxu0
    %v1252 = vmax.f32 %v1185, 0.0
    %v1253 = vmax.f32 %v1187, 0.0
    %v1254 = vmax.f32 %v1236, 0.0
    %v1255 = vmax.f32 %v1238, 0.0
    %v1256 = vmax.f32 %v1189, 0.0
    %v1257 = vmax.f32 %v1191, 0.0
    %v1258 = vmax.f32 %v1240, 0.0
    %v1259 = vmax.f32 %v1242, 0.0
    %v1260 = vmax.f32 %v1195, 0.0
    %v1261 = vmax.f32 %v1197, 0.0
    %v1262 = vmax.f32 %v1246, 0.0
    %v1263 = vmax.f32 %v1248, 0.0
    %1264 = vrot.lane.b32.xlu0 %v1252, 17
    %v1265 = vpop.permute.xlu0 %1264
    %1266 = vrot.lane.b32.xlu0 %v1256, 17
    %v1267 = vpop.permute.xlu0 %1266
    %1268 = vrot.lane.b32.xlu0 %v1260, 17
    %v1269 = vpop.permute.xlu0 %1268
    %1270 = vrot.lane.b32.xlu0 %v1253, 17
    %v1271 = vpop.permute.xlu0 %1270
    %1272 = vrot.lane.b32.xlu0 %v1257, 17
    %v1273 = vpop.permute.xlu0 %1272
    %1274 = vrot.lane.b32.xlu0 %v1261, 17
    %v1275 = vpop.permute.xlu0 %1274
    %1276 = vrot.lane.b32.xlu0 %v1254, 17
    %v1277 = vpop.permute.xlu0 %1276
    %1278 = vrot.lane.b32.xlu0 %v1258, 17
    %v1279 = vpop.permute.xlu0 %1278
    %1280 = vrot.lane.b32.xlu0 %v1262, 17
    %v1281 = vpop.permute.xlu0 %1280
    %1282 = vrot.lane.b32.xlu0 %v1255, 17
    %v1283 = vpop.permute.xlu0 %1282
    %1284 = vrot.lane.b32.xlu0 %v1259, 17
    %v1285 = vpop.permute.xlu0 %1284
    %1286 = vrot.lane.b32.xlu0 %v1263, 17
    %v1287 = vpop.permute.xlu0 %1286
    %v1288 = vsel %vm104, %v1277, %v1283
    %v1289 = vsel %vm104, %v1279, %v1285
    %v1290 = vsel %vm104, %v1281, %v1287
    %v1291 = vsel %vm104, %v1271, %v1277
    %v1292 = vsel %vm104, %v1273, %v1279
    %v1293 = vsel %vm104, %v1275, %v1281
    %v1294 = vsel %vm104, %v1265, %v1271
    %v1295 = vsel %vm104, %v1267, %v1273
    %v1296 = vsel %vm104, %v1269, %v1275
    %v1297 = vsel %vm104, %v1283, %v1265
    %v1298 = vsel %vm104, %v1285, %v1267
    %v1299 = vsel %vm104, %v1287, %v1269
    %v1300 = vmul.f32 %v1297, %v114
    %v1301 = vmul.f32 %v1294, %v118
    %v1302 = vmul.f32 %v1291, %v122
    %v1303 = vmul.f32 %v1288, %v126
    %v1304 = vmul.f32 %v1298, %v114
    %v1305 = vmul.f32 %v1295, %v118
    %v1306 = vmul.f32 %v1292, %v122
    %v1307 = vmul.f32 %v1289, %v126
    %v1308 = vmul.f32 %v1299, %v114
    %v1309 = vmul.f32 %v1296, %v118
    %v1310 = vmul.f32 %v1293, %v122
    %v1311 = vmul.f32 %v1290, %v126
    %1312 = vrot.lane.b32.xlu0 %v1252, 16
    %v1313 = vpop.permute.xlu0 %1312
    %1314 = vrot.lane.b32.xlu0 %v1256, 16
    %v1315 = vpop.permute.xlu0 %1314
    %1316 = vrot.lane.b32.xlu0 %v1260, 16
    %v1317 = vpop.permute.xlu0 %1316
    %1318 = vrot.lane.b32.xlu0 %v1253, 16
    %v1319 = vpop.permute.xlu0 %1318
    %1320 = vrot.lane.b32.xlu0 %v1257, 16
    %v1321 = vpop.permute.xlu0 %1320
    %1322 = vrot.lane.b32.xlu0 %v1261, 16
    %v1323 = vpop.permute.xlu0 %1322
    %1324 = vrot.lane.b32.xlu0 %v1254, 16
    %v1325 = vpop.permute.xlu0 %1324
    %1326 = vrot.lane.b32.xlu0 %v1258, 16
    %v1327 = vpop.permute.xlu0 %1326
    %1328 = vrot.lane.b32.xlu0 %v1262, 16
    %v1329 = vpop.permute.xlu0 %1328
    %1330 = vrot.lane.b32.xlu0 %v1255, 16
    %v1331 = vpop.permute.xlu0 %1330
    %1332 = vrot.lane.b32.xlu0 %v1259, 16
    %v1333 = vpop.permute.xlu0 %1332
    %1334 = vrot.lane.b32.xlu0 %v1263, 16
    %v1335 = vpop.permute.xlu0 %1334
    %v1336 = vsel %vm143, %v1325, %v1331
    %v1337 = vsel %vm143, %v1327, %v1333
    %v1338 = vsel %vm143, %v1329, %v1335
    %v1339 = vsel %vm143, %v1319, %v1325
    %v1340 = vsel %vm143, %v1321, %v1327
    %v1341 = vsel %vm143, %v1323, %v1329
    %v1342 = vsel %vm143, %v1313, %v1319
    %v1343 = vsel %vm143, %v1315, %v1321
    %v1344 = vsel %vm143, %v1317, %v1323
    %v1345 = vsel %vm143, %v1331, %v1313
    %v1346 = vsel %vm143, %v1333, %v1315
    %v1347 = vsel %vm143, %v1335, %v1317
    %v1348 = vmul.f32 %v1345, %v154
    %v1349 = vmul.f32 %v1342, %v158
    %v1350 = vmul.f32 %v1339, %v162
    %v1351 = vmul.f32 %v1336, %v166
    %v1352 = vmul.f32 %v1346, %v154
    %v1353 = vmul.f32 %v1343, %v158
    %v1354 = vmul.f32 %v1340, %v162
    %v1355 = vmul.f32 %v1337, %v166
    %v1356 = vmul.f32 %v1347, %v154
    %v1357 = vmul.f32 %v1344, %v158
    %v1358 = vmul.f32 %v1341, %v162
    %v1359 = vmul.f32 %v1338, %v166
    %1360 = vrot.lane.b32.xlu0 %v1252, 15
    %v1361 = vpop.permute.xlu0 %1360
    %1362 = vrot.lane.b32.xlu0 %v1256, 15
    %v1363 = vpop.permute.xlu0 %1362
    %1364 = vrot.lane.b32.xlu0 %v1260, 15
    %v1365 = vpop.permute.xlu0 %1364
    %1366 = vrot.lane.b32.xlu0 %v1253, 15
    %v1367 = vpop.permute.xlu0 %1366
    %1368 = vrot.lane.b32.xlu0 %v1257, 15
    %v1369 = vpop.permute.xlu0 %1368
    %1370 = vrot.lane.b32.xlu0 %v1261, 15
    %v1371 = vpop.permute.xlu0 %1370
    %1372 = vrot.lane.b32.xlu0 %v1254, 15
    %v1373 = vpop.permute.xlu0 %1372
    %1374 = vrot.lane.b32.xlu0 %v1258, 15
    %v1375 = vpop.permute.xlu0 %1374
    %1376 = vrot.lane.b32.xlu0 %v1262, 15
    %v1377 = vpop.permute.xlu0 %1376
    %1378 = vrot.lane.b32.xlu0 %v1255, 15
    %v1379 = vpop.permute.xlu0 %1378
    %1380 = vrot.lane.b32.xlu0 %v1259, 15
    %v1381 = vpop.permute.xlu0 %1380
    %1382 = vrot.lane.b32.xlu0 %v1263, 15
    %v1383 = vpop.permute.xlu0 %1382
    %v1384 = vsel %vm183, %v1373, %v1379
    %v1385 = vsel %vm183, %v1375, %v1381
    %v1386 = vsel %vm183, %v1377, %v1383
    %v1387 = vsel %vm183, %v1367, %v1373
    %v1388 = vsel %vm183, %v1369, %v1375
    %v1389 = vsel %vm183, %v1371, %v1377
    %v1390 = vsel %vm183, %v1361, %v1367
    %v1391 = vsel %vm183, %v1363, %v1369
    %v1392 = vsel %vm183, %v1365, %v1371
    %v1393 = vsel %vm183, %v1379, %v1361
    %v1394 = vsel %vm183, %v1381, %v1363
    %v1395 = vsel %vm183, %v1383, %v1365
    %v1396 = vmul.f32 %v1393, %v194
    %v1397 = vmul.f32 %v1390, %v198
    %v1398 = vmul.f32 %v1387, %v202
    %v1399 = vmul.f32 %v1384, %v206
    %v1400 = vmul.f32 %v1394, %v194
    %v1401 = vmul.f32 %v1391, %v198
    %v1402 = vmul.f32 %v1388, %v202
    %v1403 = vmul.f32 %v1385, %v206
    %v1404 = vmul.f32 %v1395, %v194
    %v1405 = vmul.f32 %v1392, %v198
    %v1406 = vmul.f32 %v1389, %v202
    %v1407 = vmul.f32 %v1386, %v206
    %1408 = vrot.lane.b32.xlu0 %v1252, 1
    %v1409 = vpop.permute.xlu0 %1408
    %1410 = vrot.lane.b32.xlu0 %v1256, 1
    %v1411 = vpop.permute.xlu0 %1410
    %1412 = vrot.lane.b32.xlu0 %v1260, 1
    %v1413 = vpop.permute.xlu0 %1412
    %1414 = vrot.lane.b32.xlu0 %v1253, 1
    %v1415 = vpop.permute.xlu0 %1414
    %1416 = vrot.lane.b32.xlu0 %v1257, 1
    %v1417 = vpop.permute.xlu0 %1416
    %1418 = vrot.lane.b32.xlu0 %v1261, 1
    %v1419 = vpop.permute.xlu0 %1418
    %1420 = vrot.lane.b32.xlu0 %v1254, 1
    %v1421 = vpop.permute.xlu0 %1420
    %1422 = vrot.lane.b32.xlu0 %v1258, 1
    %v1423 = vpop.permute.xlu0 %1422
    %1424 = vrot.lane.b32.xlu0 %v1262, 1
    %v1425 = vpop.permute.xlu0 %1424
    %1426 = vrot.lane.b32.xlu0 %v1255, 1
    %v1427 = vpop.permute.xlu0 %1426
    %1428 = vrot.lane.b32.xlu0 %v1259, 1
    %v1429 = vpop.permute.xlu0 %1428
    %1430 = vrot.lane.b32.xlu0 %v1263, 1
    %v1431 = vpop.permute.xlu0 %1430
    %v1432 = vsel %vm223, %v1421, %v1427
    %v1433 = vsel %vm223, %v1423, %v1429
    %v1434 = vsel %vm223, %v1425, %v1431
    %v1435 = vsel %vm223, %v1415, %v1421
    %v1436 = vsel %vm223, %v1417, %v1423
    %v1437 = vsel %vm223, %v1419, %v1425
    %v1438 = vsel %vm223, %v1409, %v1415
    %v1439 = vsel %vm223, %v1411, %v1417
    %v1440 = vsel %vm223, %v1413, %v1419
    %v1441 = vsel %vm223, %v1427, %v1409
    %v1442 = vsel %vm223, %v1429, %v1411
    %v1443 = vsel %vm223, %v1431, %v1413
    %v1444 = vmul.f32 %v1441, %v234
    %v1445 = vmul.f32 %v1438, %v238
    %v1446 = vmul.f32 %v1435, %v242
    %v1447 = vmul.f32 %v1432, %v246
    %v1448 = vmul.f32 %v1442, %v234
    %v1449 = vmul.f32 %v1439, %v238
    %v1450 = vmul.f32 %v1436, %v242
    %v1451 = vmul.f32 %v1433, %v246
    %v1452 = vmul.f32 %v1443, %v234
    %v1453 = vmul.f32 %v1440, %v238
    %v1454 = vmul.f32 %v1437, %v242
    %v1455 = vmul.f32 %v1434, %v246
    %1456 = vrot.lane.b32.xlu0 %v1252, 127
    %v1457 = vpop.permute.xlu0 %1456
    %1458 = vrot.lane.b32.xlu0 %v1256, 127
    %v1459 = vpop.permute.xlu0 %1458
    %1460 = vrot.lane.b32.xlu0 %v1260, 127
    %v1461 = vpop.permute.xlu0 %1460
    %1462 = vrot.lane.b32.xlu0 %v1253, 127
    %v1463 = vpop.permute.xlu0 %1462
    %1464 = vrot.lane.b32.xlu0 %v1257, 127
    %v1465 = vpop.permute.xlu0 %1464
    %1466 = vrot.lane.b32.xlu0 %v1261, 127
    %v1467 = vpop.permute.xlu0 %1466
    %1468 = vrot.lane.b32.xlu0 %v1254, 127
    %v1469 = vpop.permute.xlu0 %1468
    %1470 = vrot.lane.b32.xlu0 %v1258, 127
    %v1471 = vpop.permute.xlu0 %1470
    %1472 = vrot.lane.b32.xlu0 %v1262, 127
    %v1473 = vpop.permute.xlu0 %1472
    %1474 = vrot.lane.b32.xlu0 %v1255, 127
    %v1475 = vpop.permute.xlu0 %1474
    %1476 = vrot.lane.b32.xlu0 %v1259, 127
    %v1477 = vpop.permute.xlu0 %1476
    %1478 = vrot.lane.b32.xlu0 %v1263, 127
    %v1479 = vpop.permute.xlu0 %1478
    %v1480 = vsel %vm263, %v1469, %v1475
    %v1481 = vsel %vm263, %v1471, %v1477
    %v1482 = vsel %vm263, %v1473, %v1479
    %v1483 = vsel %vm263, %v1463, %v1469
    %v1484 = vsel %vm263, %v1465, %v1471
    %v1485 = vsel %vm263, %v1467, %v1473
    %v1486 = vsel %vm263, %v1457, %v1463
    %v1487 = vsel %vm263, %v1459, %v1465
    %v1488 = vsel %vm263, %v1461, %v1467
    %v1489 = vsel %vm263, %v1475, %v1457
    %v1490 = vsel %vm263, %v1477, %v1459
    %v1491 = vsel %vm263, %v1479, %v1461
    %v1492 = vmul.f32 %v1486, %v274
    %v1493 = vmul.f32 %v1483, %v278
    %v1494 = vmul.f32 %v1480, %v282
    %v1495 = vmul.f32 %v1489, %v286
    %v1496 = vmul.f32 %v1487, %v274
    %v1497 = vmul.f32 %v1484, %v278
    %v1498 = vmul.f32 %v1481, %v282
    %v1499 = vmul.f32 %v1490, %v286
    %v1500 = vmul.f32 %v1488, %v274
    %v1501 = vmul.f32 %v1485, %v278
    %v1502 = vmul.f32 %v1482, %v282
    %v1503 = vmul.f32 %v1491, %v286
    %1504 = vrot.lane.b32.xlu0 %v1252, 113
    %v1505 = vpop.permute.xlu0 %1504
    %1506 = vrot.lane.b32.xlu0 %v1256, 113
    %v1507 = vpop.permute.xlu0 %1506
    %1508 = vrot.lane.b32.xlu0 %v1260, 113
    %v1509 = vpop.permute.xlu0 %1508
    %1510 = vrot.lane.b32.xlu0 %v1253, 113
    %v1511 = vpop.permute.xlu0 %1510
    %1512 = vrot.lane.b32.xlu0 %v1257, 113
    %v1513 = vpop.permute.xlu0 %1512
    %1514 = vrot.lane.b32.xlu0 %v1261, 113
    %v1515 = vpop.permute.xlu0 %1514
    %1516 = vrot.lane.b32.xlu0 %v1254, 113
    %v1517 = vpop.permute.xlu0 %1516
    %1518 = vrot.lane.b32.xlu0 %v1258, 113
    %v1519 = vpop.permute.xlu0 %1518
    %1520 = vrot.lane.b32.xlu0 %v1262, 113
    %v1521 = vpop.permute.xlu0 %1520
    %1522 = vrot.lane.b32.xlu0 %v1255, 113
    %v1523 = vpop.permute.xlu0 %1522
    %1524 = vrot.lane.b32.xlu0 %v1259, 113
    %v1525 = vpop.permute.xlu0 %1524
    %1526 = vrot.lane.b32.xlu0 %v1263, 113
    %v1527 = vpop.permute.xlu0 %1526
    %v1528 = vsel %vm303, %v1517, %v1523
    %v1529 = vsel %vm303, %v1519, %v1525
    %v1530 = vsel %vm303, %v1521, %v1527
    %v1531 = vsel %vm303, %v1511, %v1517
    %v1532 = vsel %vm303, %v1513, %v1519
    %v1533 = vsel %vm303, %v1515, %v1521
    %v1534 = vsel %vm303, %v1505, %v1511
    %v1535 = vsel %vm303, %v1507, %v1513
    %v1536 = vsel %vm303, %v1509, %v1515
    %v1537 = vsel %vm303, %v1523, %v1505
    %v1538 = vsel %vm303, %v1525, %v1507
    %v1539 = vsel %vm303, %v1527, %v1509
    %v1540 = vmul.f32 %v1534, %v314
    %v1541 = vmul.f32 %v1531, %v318
    %v1542 = vmul.f32 %v1528, %v322
    %v1543 = vmul.f32 %v1537, %v326
    %v1544 = vmul.f32 %v1535, %v314
    %v1545 = vmul.f32 %v1532, %v318
    %v1546 = vmul.f32 %v1529, %v322
    %v1547 = vmul.f32 %v1538, %v326
    %v1548 = vmul.f32 %v1536, %v314
    %v1549 = vmul.f32 %v1533, %v318
    %v1550 = vmul.f32 %v1530, %v322
    %v1551 = vmul.f32 %v1539, %v326
    %1552 = vrot.lane.b32.xlu0 %v1252, 112
    %v1553 = vpop.permute.xlu0 %1552
    %1554 = vrot.lane.b32.xlu0 %v1256, 112
    %v1555 = vpop.permute.xlu0 %1554
    %1556 = vrot.lane.b32.xlu0 %v1260, 112
    %v1557 = vpop.permute.xlu0 %1556
    %1558 = vrot.lane.b32.xlu0 %v1253, 112
    %v1559 = vpop.permute.xlu0 %1558
    %1560 = vrot.lane.b32.xlu0 %v1257, 112
    %v1561 = vpop.permute.xlu0 %1560
    %1562 = vrot.lane.b32.xlu0 %v1261, 112
    %v1563 = vpop.permute.xlu0 %1562
    %1564 = vrot.lane.b32.xlu0 %v1254, 112
    %v1565 = vpop.permute.xlu0 %1564
    %1566 = vrot.lane.b32.xlu0 %v1258, 112
    %v1567 = vpop.permute.xlu0 %1566
    %1568 = vrot.lane.b32.xlu0 %v1262, 112
    %v1569 = vpop.permute.xlu0 %1568
    %1570 = vrot.lane.b32.xlu0 %v1255, 112
    %v1571 = vpop.permute.xlu0 %1570
    %1572 = vrot.lane.b32.xlu0 %v1259, 112
    %v1573 = vpop.permute.xlu0 %1572
    %1574 = vrot.lane.b32.xlu0 %v1263, 112
    %v1575 = vpop.permute.xlu0 %1574
    %v1576 = vsel %vm343, %v1565, %v1571
    %v1577 = vsel %vm343, %v1567, %v1573
    %v1578 = vsel %vm343, %v1569, %v1575
    %v1579 = vsel %vm343, %v1559, %v1565
    %v1580 = vsel %vm343, %v1561, %v1567
    %v1581 = vsel %vm343, %v1563, %v1569
    %v1582 = vsel %vm343, %v1553, %v1559
    %v1583 = vsel %vm343, %v1555, %v1561
    %v1584 = vsel %vm343, %v1557, %v1563
    %v1585 = vsel %vm343, %v1571, %v1553
    %v1586 = vsel %vm343, %v1573, %v1555
    %v1587 = vsel %vm343, %v1575, %v1557
    %v1588 = vmul.f32 %v1582, %v354
    %v1589 = vmul.f32 %v1579, %v358
    %v1590 = vmul.f32 %v1576, %v362
    %v1591 = vmul.f32 %v1585, %v366
    %v1592 = vmul.f32 %v1583, %v354
    %v1593 = vmul.f32 %v1580, %v358
    %v1594 = vmul.f32 %v1577, %v362
    %v1595 = vmul.f32 %v1586, %v366
    %v1596 = vmul.f32 %v1584, %v354
    %v1597 = vmul.f32 %v1581, %v358
    %v1598 = vmul.f32 %v1578, %v362
    %v1599 = vmul.f32 %v1587, %v366
    %1600 = vrot.lane.b32.xlu0 %v1252, 111
    %v1601 = vpop.permute.xlu0 %1600
    %1602 = vrot.lane.b32.xlu0 %v1256, 111
    %v1603 = vpop.permute.xlu0 %1602
    %1604 = vrot.lane.b32.xlu0 %v1260, 111
    %v1605 = vpop.permute.xlu0 %1604
    %1606 = vrot.lane.b32.xlu0 %v1253, 111
    %v1607 = vpop.permute.xlu0 %1606
    %1608 = vrot.lane.b32.xlu0 %v1257, 111
    %v1609 = vpop.permute.xlu0 %1608
    %1610 = vrot.lane.b32.xlu0 %v1261, 111
    %v1611 = vpop.permute.xlu0 %1610
    %1612 = vrot.lane.b32.xlu0 %v1254, 111
    %v1613 = vpop.permute.xlu0 %1612
    %1614 = vrot.lane.b32.xlu0 %v1258, 111
    %v1615 = vpop.permute.xlu0 %1614
    %1616 = vrot.lane.b32.xlu0 %v1262, 111
    %v1617 = vpop.permute.xlu0 %1616
    %1618 = vrot.lane.b32.xlu0 %v1255, 111
    %v1619 = vpop.permute.xlu0 %1618
    %1620 = vrot.lane.b32.xlu0 %v1259, 111
    %v1621 = vpop.permute.xlu0 %1620
    %1622 = vrot.lane.b32.xlu0 %v1263, 111
    %v1623 = vpop.permute.xlu0 %1622
    %v1624 = vsel %vm383, %v1613, %v1619
    %v1625 = vsel %vm383, %v1615, %v1621
    %v1626 = vsel %vm383, %v1617, %v1623
    %v1627 = vsel %vm383, %v1607, %v1613
    %v1628 = vsel %vm383, %v1609, %v1615
    %v1629 = vsel %vm383, %v1611, %v1617
    %v1630 = vsel %vm383, %v1601, %v1607
    %v1631 = vsel %vm383, %v1603, %v1609
    %v1632 = vsel %vm383, %v1605, %v1611
    %v1633 = vsel %vm383, %v1619, %v1601
    %v1634 = vsel %vm383, %v1621, %v1603
    %v1635 = vsel %vm383, %v1623, %v1605
    %v1636 = vmul.f32 %v1630, %v394
    %v1637 = vmul.f32 %v1627, %v398
    %v1638 = vmul.f32 %v1624, %v402
    %v1639 = vmul.f32 %v1633, %v406
    %v1640 = vmul.f32 %v1631, %v394
    %v1641 = vmul.f32 %v1628, %v398
    %v1642 = vmul.f32 %v1625, %v402
    %v1643 = vmul.f32 %v1634, %v406
    %v1644 = vmul.f32 %v1632, %v394
    %v1645 = vmul.f32 %v1629, %v398
    %v1646 = vmul.f32 %v1626, %v402
    %v1647 = vmul.f32 %v1635, %v406
    %v1660 = vrot.slane %v1348, 4
    %v1661 = vrot.slane %v1349, 4
    %v1662 = vrot.slane %v1350, 4
    %v1663 = vrot.slane %v1351, 4
    %v1664 = vrot.slane %v1352, 4
    %v1665 = vsel %vm486, %v1660, %v1664
    %v1666 = vrot.slane %v1353, 4
    %v1667 = vsel %vm486, %v1661, %v1666
    %v1668 = vrot.slane %v1354, 4
    %v1669 = vsel %vm486, %v1662, %v1668
    %v1670 = vrot.slane %v1355, 4
    %v1671 = vsel %vm486, %v1663, %v1670
    %v1672 = vrot.slane %v1356, 4
    %v1673 = vsel %vm486, %v1664, %v1672
    %v1674 = vrot.slane %v1357, 4
    %v1675 = vsel %vm486, %v1666, %v1674
    %v1676 = vrot.slane %v1358, 4
    %v1677 = vsel %vm486, %v1668, %v1676
    %v1678 = vrot.slane %v1359, 4
    %v1679 = vsel %vm486, %v1670, %v1678
    %v1704 = vrot.slane %v1444, 4
    %v1705 = vrot.slane %v1445, 4
    %v1706 = vrot.slane %v1446, 4
    %v1707 = vrot.slane %v1447, 4
    %v1708 = vrot.slane %v1448, 4
    %v1709 = vsel %vm486, %v1704, %v1708
    %v1710 = vrot.slane %v1449, 4
    %v1711 = vsel %vm486, %v1705, %v1710
    %v1712 = vrot.slane %v1450, 4
    %v1713 = vsel %vm486, %v1706, %v1712
    %v1714 = vrot.slane %v1451, 4
    %v1715 = vsel %vm486, %v1707, %v1714
    %v1716 = vrot.slane %v1452, 4
    %v1717 = vsel %vm486, %v1708, %v1716
    %v1718 = vrot.slane %v1453, 4
    %v1719 = vsel %vm486, %v1710, %v1718
    %v1720 = vrot.slane %v1454, 4
    %v1721 = vsel %vm486, %v1712, %v1720
    %v1722 = vrot.slane %v1455, 4
    %v1723 = vsel %vm486, %v1714, %v1722
    %v1748 = vrot.slane %v1492, 4
    %v1749 = vrot.slane %v1493, 4
    %v1750 = vrot.slane %v1494, 4
    %v1751 = vrot.slane %v1495, 4
    %v1752 = vrot.slane %v1496, 4
    %v1753 = vsel %vm486, %v1748, %v1752
    %v1754 = vrot.slane %v1497, 4
    %v1755 = vsel %vm486, %v1749, %v1754
    %v1756 = vrot.slane %v1498, 4
    %v1757 = vsel %vm486, %v1750, %v1756
    %v1758 = vrot.slane %v1499, 4
    %v1759 = vsel %vm486, %v1751, %v1758
    %v1760 = vrot.slane %v1500, 4
    %v1761 = vsel %vm486, %v1752, %v1760
    %v1762 = vrot.slane %v1501, 4
    %v1763 = vsel %vm486, %v1754, %v1762
    %v1764 = vrot.slane %v1502, 4
    %v1765 = vsel %vm486, %v1756, %v1764
    %v1766 = vrot.slane %v1503, 4
    %v1767 = vsel %vm486, %v1758, %v1766
    %v1792 = vrot.slane %v1588, 4
    %v1793 = vrot.slane %v1589, 4
    %v1794 = vrot.slane %v1590, 4
    %v1795 = vrot.slane %v1591, 4
    %v1796 = vrot.slane %v1592, 4
    %v1797 = vsel %vm486, %v1792, %v1796
    %v1798 = vrot.slane %v1593, 4
    %v1799 = vsel %vm486, %v1793, %v1798
    %v1800 = vrot.slane %v1594, 4
    %v1801 = vsel %vm486, %v1794, %v1800
    %v1802 = vrot.slane %v1595, 4
    %v1803 = vsel %vm486, %v1795, %v1802
    %v1804 = vrot.slane %v1596, 4
    %v1805 = vsel %vm486, %v1796, %v1804
    %v1806 = vrot.slane %v1597, 4
    %v1807 = vsel %vm486, %v1798, %v1806
    %v1808 = vrot.slane %v1598, 4
    %v1809 = vsel %vm486, %v1800, %v1808
    %v1810 = vrot.slane %v1599, 4
    %v1811 = vsel %vm486, %v1802, %v1810
    %v1824 = vsel %vm486, %v1308, %v1660
    %v1825 = vsel %vm486, %v1309, %v1661
    %v1826 = vsel %vm486, %v1310, %v1662
    %v1827 = vsel %vm486, %v1311, %v1663
    %v1828 = vsel %vm486, %v1404, %v1704
    %v1829 = vsel %vm486, %v1405, %v1705
    %v1830 = vsel %vm486, %v1406, %v1706
    %v1831 = vsel %vm486, %v1407, %v1707
    %v1832 = vsel %vm486, %v1260, %v1748
    %v1833 = vsel %vm486, %v1261, %v1749
    %v1834 = vsel %vm486, %v1262, %v1750
    %v1835 = vsel %vm486, %v1263, %v1751
    %v1836 = vsel %vm486, %v1548, %v1792
    %v1837 = vsel %vm486, %v1549, %v1793
    %v1838 = vsel %vm486, %v1550, %v1794
    %v1839 = vsel %vm486, %v1551, %v1795
    %v1840 = vsel %vm486, %v1644, %v469
    %v1841 = vsel %vm486, %v1645, %v473
    %v1842 = vsel %vm486, %v1646, %v477
    %v1843 = vsel %vm486, %v1647, %v481
    %v1844 = vpack.c.bf16 %v1304, %v1300
    %v1845 = vpack.c.bf16 %v1305, %v1301
    %v1846 = vpack.c.bf16 %v1306, %v1302
    %v1847 = vpack.c.bf16 %v1307, %v1303
    %v1848 = vpack.c.bf16 %v1665, %v1824
    %v1849 = vpack.c.bf16 %v1667, %v1825
    %v1850 = vpack.c.bf16 %v1669, %v1826
    %v1851 = vpack.c.bf16 %v1671, %v1827
    %v1852 = vpack.c.bf16 %v1396, %v1673
    %v1853 = vpack.c.bf16 %v1397, %v1675
    %v1854 = vpack.c.bf16 %v1398, %v1677
    %v1855 = vpack.c.bf16 %v1399, %v1679
    %v1856 = vpack.c.bf16 %v1828, %v1400
    %v1857 = vpack.c.bf16 %v1829, %v1401
    %v1858 = vpack.c.bf16 %v1830, %v1402
    %v1859 = vpack.c.bf16 %v1831, %v1403
    %v1860 = vpack.c.bf16 %v1717, %v1709
    %v1861 = vpack.c.bf16 %v1719, %v1711
    %v1862 = vpack.c.bf16 %v1721, %v1713
    %v1863 = vpack.c.bf16 %v1723, %v1715
    %v1864 = vpack.c.bf16 %v1256, %v1252
    %v1865 = vpack.c.bf16 %v1257, %v1253
    %v1866 = vpack.c.bf16 %v1258, %v1254
    %v1867 = vpack.c.bf16 %v1259, %v1255
    %v1868 = vpack.c.bf16 %v1753, %v1832
    %v1869 = vpack.c.bf16 %v1755, %v1833
    %v1870 = vpack.c.bf16 %v1757, %v1834
    %v1871 = vpack.c.bf16 %v1759, %v1835
    %v1872 = vpack.c.bf16 %v1540, %v1761
    %v1873 = vpack.c.bf16 %v1541, %v1763
    %v1874 = vpack.c.bf16 %v1542, %v1765
    %v1875 = vpack.c.bf16 %v1543, %v1767
    %v1876 = vpack.c.bf16 %v1836, %v1544
    %v1877 = vpack.c.bf16 %v1837, %v1545
    %v1878 = vpack.c.bf16 %v1838, %v1546
    %v1879 = vpack.c.bf16 %v1839, %v1547
    %v1880 = vpack.c.bf16 %v1805, %v1797
    %v1881 = vpack.c.bf16 %v1807, %v1799
    %v1882 = vpack.c.bf16 %v1809, %v1801
    %v1883 = vpack.c.bf16 %v1811, %v1803
    %v1884 = vpack.c.bf16 %v1640, %v1636
    %v1885 = vpack.c.bf16 %v1641, %v1637
    %v1886 = vpack.c.bf16 %v1642, %v1638
    %v1887 = vpack.c.bf16 %v1643, %v1639
    %v1888 = vpack.c.bf16 %v1840, %v1840
    %v1889 = vpack.c.bf16 %v1841, %v1841
    %v1890 = vpack.c.bf16 %v1842, %v1842
    %v1891 = vpack.c.bf16 %v1843, %v1843
    %v1892 = vld [vmem:[#allocation10] sm:$0xff]
    %v1894 = vunpack.c.l.b16 %v1892
    %v1895 = vunpack.c.h.b16 %v1892
    %v1896 = vpack.c.b16 %v1894, %v1894
    %v1897 = vpack.c.b16 %v1895, %v1895
    %vm1899 = vcmask 433152
    %v1901 = vsel %vm1899, %v1897, 0
    %v1904 = vand.u32 %v1888, %v533
    %v1907 = vand.u32 %v1889, %v533
    %v1910 = vand.u32 %v1890, %v533
    %v1913 = vand.u32 %v1891, %v533
    %1915 = vmatprep.subr.bf16.mxu0 %v1873
    %1916 = vmatpush1.bf16.msra.mxu0 %v1872
    %1917 = vmatprep.subr.bf16.mxu0 %v1869
    %1918 = vmatpush1.bf16.msra.mxu0 %v1868
    %1919 = vmatprep.subr.bf16.mxu0 %v1865
    %1920 = vmatpush1.bf16.msra.mxu0 %v1864
    %1921 = vmatprep.subr.bf16.mxu0 %v1861
    %1922 = vmatpush1.bf16.msra.mxu0 %v1860
    %1923 = vmatprep.subr.bf16.mxu0 %v1857
    %1924 = vmatpush1.bf16.msra.mxu0 %v1856
    %1925 = vmatprep.subr.bf16.mxu0 %v1853
    %1926 = vmatpush1.bf16.msra.mxu0 %v1852
    %1927 = vmatprep.subr.bf16.mxu0 %v1849
    %1928 = vmatpush1.bf16.msra.mxu0 %v1848
    %1929 = vmatprep.subr.bf16.mxu0 %v1845
    %1930 = vmatpush1.bf16.msra.mxu0 %v1844
    %1931 = vmatprep.subr.bf16.mxu0 0
    %1932 = vmatpush2.bf16.msra.mxu0 0
    %1933 = vmatprep.subr.bf16.mxu0 0
    %1934 = vmatpush2.bf16.msra.mxu0 0
    %1935 = vmatprep.subr.bf16.mxu0 0
    %1936 = vmatpush2.bf16.msra.mxu0 0
    %1937 = vmatprep.subr.bf16.mxu0 0
    %1938 = vmatpush2.bf16.msra.mxu0 0
    %1939 = vmatprep.subr.bf16.mxu0 %v1907
    %1940 = vmatpush2.bf16.msra.mxu0 %v1904
    %1941 = vmatprep.subr.bf16.mxu0 %v1885
    %1942 = vmatpush2.bf16.msra.mxu0 %v1884
    %1943 = vmatprep.subr.bf16.mxu0 %v1881
    %1944 = vmatpush2.bf16.msra.mxu0 %v1880
    %1945 = vmatprep.subr.bf16.mxu0 %v1877
    %1946 = vmatpush2.bf16.msra.mxu0 %v1876
    %1947 = vmatprep.mubr.bf16.mxu0 %v1901
    %1948 = vmatmul.mubr.bf16.gmra.mxu0 %v1896
    %v1949 = vpop.f32.mrf.mxu0
    %v1950 = vadd.f32 0.0, %v1949
    %v1951 = vpop.f32.mrf.mxu0
    %v1952 = vadd.f32 0.0, %v1951
    %v1953 = vpop.f32.mrf.mxu0
    %v1954 = vpop.f32.mrf.mxu0
    %1955 = vdwg.mxu0
    %1956 = vmatprep.subr.bf16.mxu0 %v1875
    %1957 = vmatpush1.bf16.msra.mxu0 %v1874
    %1958 = vmatprep.subr.bf16.mxu0 %v1871
    %1959 = vmatpush1.bf16.msra.mxu0 %v1870
    %1960 = vmatprep.subr.bf16.mxu0 %v1867
    %1961 = vmatpush1.bf16.msra.mxu0 %v1866
    %1962 = vmatprep.subr.bf16.mxu0 %v1863
    %1963 = vmatpush1.bf16.msra.mxu0 %v1862
    %1964 = vmatprep.subr.bf16.mxu0 %v1859
    %1965 = vmatpush1.bf16.msra.mxu0 %v1858
    %1966 = vmatprep.subr.bf16.mxu0 %v1855
    %1967 = vmatpush1.bf16.msra.mxu0 %v1854
    %1968 = vmatprep.subr.bf16.mxu0 %v1851
    %1969 = vmatpush1.bf16.msra.mxu0 %v1850
    %1970 = vmatprep.subr.bf16.mxu0 %v1847
    %1971 = vmatpush1.bf16.msra.mxu0 %v1846
    %1972 = vmatprep.subr.bf16.mxu0 0
    %1973 = vmatpush2.bf16.msra.mxu0 0
    %1974 = vmatprep.subr.bf16.mxu0 0
    %1975 = vmatpush2.bf16.msra.mxu0 0
    %1976 = vmatprep.subr.bf16.mxu0 0
    %1977 = vmatpush2.bf16.msra.mxu0 0
    %1978 = vmatprep.subr.bf16.mxu0 0
    %1979 = vmatpush2.bf16.msra.mxu0 0
    %1980 = vmatprep.subr.bf16.mxu0 %v1913
    %1981 = vmatpush2.bf16.msra.mxu0 %v1910
    %1982 = vmatprep.subr.bf16.mxu0 %v1887
    %1983 = vmatpush2.bf16.msra.mxu0 %v1886
    %1984 = vmatprep.subr.bf16.mxu0 %v1883
    %1985 = vmatpush2.bf16.msra.mxu0 %v1882
    %1986 = vmatprep.subr.bf16.mxu0 %v1879
    %1987 = vmatpush2.bf16.msra.mxu0 %v1878
    %1988 = vmatprep.mubr.bf16.mxu0 %v1901
    %1989 = vmatmul.mubr.bf16.gmra.mxu0 %v1896
    %v1990 = vpop.f32.mrf.mxu0
    %v1991 = vadd.f32 0.0, %v1990
    %v1992 = vpop.f32.mrf.mxu0
    %v1993 = vadd.f32 0.0, %v1992
    %v1994 = vpop.f32.mrf.mxu0
    %v1995 = vpop.f32.mrf.mxu0
    %1996 = vdwg.mxu0
    %v1997 = vmax.f32 %v1950, 0.0
    %v1998 = vmax.f32 %v1952, 0.0
    %v1999 = vmax.f32 %v1991, 0.0
    %v2000 = vmax.f32 %v1993, 0.0
    %2001 = vst [vmem:[#allocation11] sm:$0xff] %v1997
    %2002 = vst [vmem:[#allocation11 + $0x8] sm:$0xff] %v1998
    %2003 = vst [vmem:[#allocation11 + $0x10] sm:$0xff] %v1999
    %2004 = vst [vmem:[#allocation11 + $0x18] sm:$0xff] %v2000
    // Predicated region
    $region42: #{tpu_custom_call.1} parent=1 // pred_check
      _
    $region43: #{tpu_custom_call.1} parent=1 // pred_check_branch
      %2006 = sbr.rel (0) target = $region45
    $region44: #{tpu_custom_call.1} parent=1 // pred_region
      %s2008 = ssub.s32 512, 512
      %2009 = vsyncadd [#allocation4], %s2008
      %s2011 = sshll.u32 [#allocation11], 4
      %s2012 = int_to_ptr.vmem [resolvable:$true] %s2011
      %2014 = dma.vmem_to_hbm [thread:$0]  %s2012, 512, %s5, [#allocation4]
    $region45: #{tpu_custom_call.1} parent=1 // pred_fallthru
      _
    // Predicated region
    $region46: #{tpu_custom_call.1} parent=1 // pred_check
      _
    $region47: #{tpu_custom_call.1} parent=1 // pred_check_branch
      %2016 = sbr.rel (0) target = $region49
    $region48: #{tpu_custom_call.1} parent=1 // pred_region
      %2017 = dma.done [#allocation4], 512
    $region49: #{tpu_custom_call.1} parent=1 // pred_fallthru
      _
    %2018 = vsyncpa [#allocation3], 1
    %2019 = vsyncpa [#allocation6], 1
    %2020 = vsyncpa [#allocation9], 1
    %2021 = vsyncpa [#allocation4], 1

</llo_original>
